<compile_context>
chip_gen: v5e
topology: v5e:2x2
jax: 0.10.0
libtpu: 0.0.40
codegen_flags: <defaults>
</compile_context>

<pallas_src>
import functools

import jax
import jax.numpy as jnp
from jax.experimental import pallas as pl
from jax.experimental.pallas import tpu as pltpu


# ---------------------------------------------------------------------------
# Fused kernel: one grid step == one batch sample, block = (t, c, hw)
# ---------------------------------------------------------------------------
def _tam_fused_kernel(x_ref, w1_ref, s1_ref, b1_ref, w2_ref,
                      w1ck_ref, s2_ref, b2_ref, w2c_ref, o_ref,
                      *, t, ksize, pad_t, pad_l):
    c = x_ref.shape[1]

    # ---- spatial adaptive_avg_pool2d -> (1,1): per-frame mean over hw lanes.
    # Built row by row so a bf16 input never needs a block-wide f32 copy.
    pooled_cols = [jnp.mean(x_ref[ti].astype(jnp.float32), axis=-1, keepdims=True)
                   for ti in range(t)]                               # t x (c, 1)
    pooled_ct = jnp.concatenate(pooled_cols, axis=-1)                # (c, t)

    # ---- G branch: Linear -> BN(eval) -> ReLU -> Linear -> Softmax(K) ----
    h1 = jnp.dot(pooled_ct, w1_ref[...], preferred_element_type=jnp.float32)  # (c, 2t)
    h1 = jnp.maximum(h1 * s1_ref[...] + b1_ref[...], 0.0)
    g = jnp.dot(h1, w2_ref[...], preferred_element_type=jnp.float32)          # (c, K)
    g = g - jnp.max(g, axis=-1, keepdims=True)
    e = jnp.exp(g)
    ck = e / jnp.sum(e, axis=-1, keepdims=True)                               # (c, K)

    # ---- L branch: Conv1d(c->c//4,K) -> BN(eval) -> ReLU -> Conv1d(c//4->c,1) -> Sigmoid
    # Temporal shifts are static slices of a zero-padded pooled tensor; the K
    # conv taps are fused into a single (c4, K*c) @ (K*c, t) MXU matmul.
    if pad_l > 0:
        zpad = jnp.zeros((c, pad_l), jnp.float32)
        pooled_pad = jnp.concatenate([zpad, pooled_ct, zpad], axis=-1)  # (c, t+2p)
    else:
        pooled_pad = pooled_ct
    stack = jnp.concatenate([pooled_pad[:, k:k + t] for k in range(ksize)],
                            axis=0)                                      # (K*c, t)
    acc1 = jnp.dot(w1ck_ref[...], stack, preferred_element_type=jnp.float32)  # (c4, t)
    acc1 = jnp.maximum(acc1 * s2_ref[...] + b2_ref[...], 0.0)
    la = jnp.dot(w2c_ref[...], acc1, preferred_element_type=jnp.float32)      # (c, t)
    la = 1.0 / (1.0 + jnp.exp(-la))

    # ---- hoisted gate products: gk[k][:, tj] == ck[:, k] * la[:, tj] ----
    gk = [ck[:, k:k + 1] * la for k in range(ksize)]                          # K x (c, t)

    # ---- gating + grouped (depthwise) temporal conv (hot streaming loop) ----
    # out[ti, cc, s] = sum_k ck[cc,k] * la[cc,tj] * x[tj, cc, s], tj = ti+k-pad
    # Boundary taps are dropped statically (equivalent to zero padding).
    for ti in range(t):
        acc = None
        for k in range(ksize):
            tj = ti + k - pad_t
            if 0 <= tj < t:
                term = gk[k][:, tj:tj + 1] * x_ref[tj].astype(jnp.float32)    # (c, hw)
                acc = term if acc is None else acc + term
        if acc is None:  # cannot happen when 2*pad_t == ksize-1; kept for safety
            acc = jnp.zeros(o_ref.shape[1:], jnp.float32)
        o_ref[ti] = acc.astype(o_ref.dtype)


# ---------------------------------------------------------------------------
# Parameter construction (deterministic, synthetic; BN in eval mode, folded)
# ---------------------------------------------------------------------------
def make_tam_params(key, in_channels, n_segment, kernel_size=3):
    t, c = n_segment, in_channels
    c4 = max(1, c // 4)
    eps = 1e-5
    ks = jax.random.split(key, 12)

    def nrm(k, shape, scale):
        return jax.random.normal(k, shape, jnp.float32) * scale

    w1 = nrm(ks[0], (t, 2 * t), 1.0 / (t ** 0.5))                  # Linear(t,2t).weight.T
    g1 = 1.0 + 0.1 * nrm(ks[1], (2 * t,), 1.0)
    be1 = 0.1 * nrm(ks[2], (2 * t,), 1.0)
    rm1 = 0.1 * nrm(ks[3], (2 * t,), 1.0)
    rv1 = 1.0 + 0.1 * jnp.abs(nrm(ks[4], (2 * t,), 1.0))
    w2 = nrm(ks[5], (2 * t, kernel_size), 1.0 / ((2 * t) ** 0.5))  # Linear(2t,K).weight.T
    w1ck = nrm(ks[6], (kernel_size, c4, c),
               1.0 / ((c * kernel_size) ** 0.5))                   # Conv1d(c,c4,K).weight, tap-major
    g2 = 1.0 + 0.1 * nrm(ks[7], (c4,), 1.0)
    be2 = 0.1 * nrm(ks[8], (c4,), 1.0)
    rm2 = 0.1 * nrm(ks[9], (c4,), 1.0)
    rv2 = 1.0 + 0.1 * jnp.abs(nrm(ks[10], (c4,), 1.0))
    w2c = nrm(ks[11], (c, c4), 1.0 / (c4 ** 0.5))                  # Conv1d(c4,c,1).weight

    s1 = (g1 / jnp.sqrt(rv1 + eps)).reshape(1, 2 * t)
    b1 = (be1 - rm1 * g1 / jnp.sqrt(rv1 + eps)).reshape(1, 2 * t)
    s2 = (g2 / jnp.sqrt(rv2 + eps)).reshape(c4, 1)
    b2 = (be2 - rm2 * g2 / jnp.sqrt(rv2 + eps)).reshape(c4, 1)
    return dict(w1=w1, s1=s1, b1=b1, w2=w2, w1ck=w1ck, s2=s2, b2=b2, w2c=w2c)


# ---------------------------------------------------------------------------
# Forward wrapper: zero-copy views only, single pallas_call, native-dtype I/O
# ---------------------------------------------------------------------------
def tam_forward(x, params, n_segment, kernel_size=3, stride=1, padding=1):
    # TODO(synk): temporal stride != 1 is not implemented (module default is 1).
    assert stride == 1
    nt, c, h, w = x.shape
    t = n_segment
    assert nt % t == 0, "leading dim must be divisible by n_segment"
    n = nt // t
    hw = h * w
    assert t + 2 * padding - kernel_size + 1 == t, \
        "output temporal length must equal n_segment"

    x4 = x.reshape(n, t, c, hw)            # zero-cost view, native dtype
    out_dtype = x.dtype
    itemsize = jnp.dtype(x.dtype).itemsize

    pad_l = kernel_size // 2
    c4 = params["w2c"].shape[1]
    # Conv1d(c->c4, K) weight flattened tap-major for the fused (c4,K*c)@(K*c,t) matmul.
    w1ck_flat = params["w1ck"].transpose(1, 0, 2).reshape(c4, kernel_size * c)

    small_args = (params["w1"], params["s1"], params["b1"], params["w2"],
                  w1ck_flat, params["s2"], params["b2"], params["w2c"])
    small_bytes = sum(int(a.size) * jnp.dtype(a.dtype).itemsize for a in small_args)

    # ---- per-generation VMEM budgeting --------------------------------------
    vmem_cap = 64 << 20                      # conservative fallback (v7x-sized)
    try:
        vmem_cap = int(pltpu.get_tpu_info().vmem_capacity_bytes)
    except Exception:
        pass
    vmem_budget = int(0.85 * vmem_cap)       # leave DMA/compiler headroom

    blk_bytes = t * c * hw * itemsize
    overhead = 2 << 20
    full_need = 4 * blk_bytes + 2 * small_bytes + overhead     # double-buffered in+out
    single_buffer = full_need > vmem_budget                    # drop to Buffered(1)
    vmem_need = (2 if single_buffer else 4) * blk_bytes + 2 * small_bytes + overhead
    # TODO(synk): if vmem_need still exceeds vmem_budget (very large c*hw on
    # v7x's 64 MiB VMEM), split into two pallas_calls: an hw-tiled pooling +
    # G/L gate kernel and an (n, hw_tiles) gating-apply kernel (both axes
    # 'parallel' so the 2 v7x TensorCores stay busy).
    # TODO(synk): for production hw not a multiple of 128 (7^2..56^2) and
    # c % 128 == 0, present the block as a flattened (t, c*hw) lane-dense slab
    # to avoid masked stores / strided DMA.

    scoped_default = (32 << 20) if vmem_cap <= (64 << 20) else (16 << 20)
    cparams = dict(dimension_semantics=("parallel",))
    if vmem_need > scoped_default:
        cparams["vmem_limit_bytes"] = int(min(vmem_need, vmem_budget))

    def big_spec():
        if single_buffer:
            return pl.BlockSpec((None, t, c, hw), lambda i: (i, 0, 0, 0),
                                pipeline_mode=pl.Buffered(1))
        return pl.BlockSpec((None, t, c, hw), lambda i: (i, 0, 0, 0))

    def _rep(arr):
        nd = arr.ndim
        return pl.BlockSpec(arr.shape, lambda i, _nd=nd: (0,) * _nd)

    # Advisory cost estimate so XLA schedules/overlaps around this HBM-bound call.
    flops_per_sample = (2 * c * t * (2 * t) + 2 * c * (2 * t) * kernel_size
                        + 2 * c4 * kernel_size * c * t + 2 * c * c4 * t
                        + kernel_size * c * t
                        + 2 * kernel_size * t * c * hw)
    cost = pl.CostEstimate(
        flops=int(n * flops_per_sample),
        transcendentals=int(n * c * (kernel_size + t)),
        bytes_accessed=int(2 * n * t * c * hw * itemsize + small_bytes))

    kernel = functools.partial(_tam_fused_kernel, t=t, ksize=kernel_size,
                               pad_t=padding, pad_l=pad_l)

    out4 = pl.pallas_call(
        kernel,
        out_shape=jax.ShapeDtypeStruct((n, t, c, hw), out_dtype),
        grid=(n,),
        in_specs=[big_spec()] + [_rep(a) for a in small_args],
        out_specs=big_spec(),
        compiler_params=pltpu.CompilerParams(**cparams),
        cost_estimate=cost,
    )(x4, *small_args)

    # (n, t, c, hw) -> (nt, c, h, w): zero-cost view, no XLA transpose.
    return out4.reshape(nt, c, h, w)


# ---------------------------------------------------------------------------
# Pure-JAX reference (same eval-mode BN fold) for a sanity check
# ---------------------------------------------------------------------------
def tam_reference(x, params, n_segment, kernel_size=3, padding=1):
    nt, c, h, w = x.shape
    t = n_segment
    n = nt // t
    K = kernel_size
    c4 = params["w2c"].shape[1]
    x = x.astype(jnp.float32)

    new_x = x.reshape(n, t, c, h, w).transpose(0, 2, 1, 3, 4)      # (n,c,t,h,w)
    pooled = new_x.reshape(n * c, t, h * w).mean(axis=-1)          # (nc, t)

    # G branch
    h1 = jnp.maximum(pooled @ params["w1"] * params["s1"] + params["b1"], 0.0)
    ck = jax.nn.softmax(h1 @ params["w2"], axis=-1)                # (nc, K)

    # L branch
    pad_l = K // 2
    p3 = pooled.reshape(n, c, t)
    ppad = jnp.pad(p3, ((0, 0), (0, 0), (pad_l, pad_l)))
    out1 = jnp.zeros((n, c4, t), jnp.float32)
    for k in range(K):
        out1 = out1 + jnp.einsum("oc,nct->not", params["w1ck"][k],
                                 ppad[:, :, k:k + t])
    out1 = jnp.maximum(out1 * params["s2"][None] + params["b2"][None], 0.0)
    la = jax.nn.sigmoid(jnp.einsum("co,not->nct", params["w2c"], out1))   # (n,c,t)

    y = new_x * la[:, :, :, None, None]
    ypad = jnp.pad(y, ((0, 0), (0, 0), (padding, padding), (0, 0), (0, 0)))
    ckr = ck.reshape(n, c, K)
    out = jnp.zeros_like(new_x)
    for k in range(K):
        out = out + ckr[:, :, k][:, :, None, None, None] * ypad[:, :, k:k + t, :, :]
    return out.transpose(0, 2, 1, 3, 4).reshape(nt, c, h, w)


if __name__ == "__main__":
    key = jax.random.PRNGKey(0)
    kx, kp = jax.random.split(key)

    n_batch, c, t, h, w = 2, 16, 8, 16, 16
    nt = n_batch * t
    x = jax.random.normal(kx, (nt, c, h, w), jnp.float32)
    params = make_tam_params(kp, in_channels=c, n_segment=t, kernel_size=3)

    fwd = jax.jit(functools.partial(tam_forward, n_segment=t, kernel_size=3,
                                    stride=1, padding=1))
    out = jax.block_until_ready(fwd(x, params))

    ref = tam_reference(x, params, n_segment=t, kernel_size=3, padding=1)
    assert out.shape == (nt, c, h, w)
    err = float(jnp.max(jnp.abs(out.astype(jnp.float32) - ref)))
    assert jnp.allclose(out.astype(jnp.float32), ref, atol=1e-2, rtol=1e-2), \
        f"max abs err {err}"
    print("KERNEL_OK")
</pallas_src>

<mosaic_0001>
module attributes {stable_mosaic.version = 11 : i64} {
  func.func @_tam_fused_kernel(%arg0: i32, %arg1: memref<1x8x16x256xf32, #tpu.memory_space<vmem>>, %arg2: memref<8x16xf32, #tpu.memory_space<vmem>>, %arg3: memref<1x16xf32, #tpu.memory_space<vmem>>, %arg4: memref<1x16xf32, #tpu.memory_space<vmem>>, %arg5: memref<16x3xf32, #tpu.memory_space<vmem>>, %arg6: memref<4x48xf32, #tpu.memory_space<vmem>>, %arg7: memref<4x1xf32, #tpu.memory_space<vmem>>, %arg8: memref<4x1xf32, #tpu.memory_space<vmem>>, %arg9: memref<16x4xf32, #tpu.memory_space<vmem>>, %arg10: memref<1x8x16x256xf32, #tpu.memory_space<vmem>>) attributes {dimension_semantics = [#tpu.dimension_semantics<parallel>], iteration_bounds = array<i64: 2>, scalar_prefetch = 0 : i64, scratch_operands = 0 : i64, tpu.core_type = #tpu.core_type<tc>, window_params = [{transform_indices = @transform_0, window_bounds = array<i64: 1, 8, 16, 256>}, {pipeline_mode = #tpu.pipeline_mode<synchronous>, transform_indices = @transform_1, window_bounds = array<i64: 8, 16>}, {pipeline_mode = #tpu.pipeline_mode<synchronous>, transform_indices = @transform_2, window_bounds = array<i64: 1, 16>}, {pipeline_mode = #tpu.pipeline_mode<synchronous>, transform_indices = @transform_3, window_bounds = array<i64: 1, 16>}, {pipeline_mode = #tpu.pipeline_mode<synchronous>, transform_indices = @transform_4, window_bounds = array<i64: 16, 3>}, {pipeline_mode = #tpu.pipeline_mode<synchronous>, transform_indices = @transform_5, window_bounds = array<i64: 4, 48>}, {pipeline_mode = #tpu.pipeline_mode<synchronous>, transform_indices = @transform_6, window_bounds = array<i64: 4, 1>}, {pipeline_mode = #tpu.pipeline_mode<synchronous>, transform_indices = @transform_7, window_bounds = array<i64: 4, 1>}, {pipeline_mode = #tpu.pipeline_mode<synchronous>, transform_indices = @transform_8, window_bounds = array<i64: 16, 4>}, {transform_indices = @transform_9, window_bounds = array<i64: 1, 8, 16, 256>}]} {
    %c0 = arith.constant 0 : index
    %c0_0 = arith.constant 0 : index
    %c0_1 = arith.constant 0 : index
    %c0_2 = arith.constant 0 : index
    %0 = vector.load %arg1[%c0, %c0_0, %c0_1, %c0_2] : memref<1x8x16x256xf32, #tpu.memory_space<vmem>>, vector<1x1x16x256xf32>
    %1 = vector.shape_cast %0 : vector<1x1x16x256xf32> to vector<16x256xf32>
    %cst = arith.constant dense<0.000000e+00> : vector<16xf32>
    %2 = vector.multi_reduction <add>, %1, %cst [1] : vector<16x256xf32> to vector<16xf32>
    %3 = vector.shape_cast %2 : vector<16xf32> to vector<16x1xf32>
    %cst_3 = arith.constant 2.560000e+02 : f32
    %4 = vector.broadcast %cst_3 : f32 to vector<16x1xf32>
    %5 = arith.divf %3, %4 : vector<16x1xf32>
    %c0_4 = arith.constant 0 : index
    %c1 = arith.constant 1 : index
    %c0_5 = arith.constant 0 : index
    %c0_6 = arith.constant 0 : index
    %6 = vector.load %arg1[%c0_4, %c1, %c0_5, %c0_6] : memref<1x8x16x256xf32, #tpu.memory_space<vmem>>, vector<1x1x16x256xf32>
    %7 = vector.shape_cast %6 : vector<1x1x16x256xf32> to vector<16x256xf32>
    %cst_7 = arith.constant dense<0.000000e+00> : vector<16xf32>
    %8 = vector.multi_reduction <add>, %7, %cst_7 [1] : vector<16x256xf32> to vector<16xf32>
    %9 = vector.shape_cast %8 : vector<16xf32> to vector<16x1xf32>
    %cst_8 = arith.constant 2.560000e+02 : f32
    %10 = vector.broadcast %cst_8 : f32 to vector<16x1xf32>
    %11 = arith.divf %9, %10 : vector<16x1xf32>
    %c0_9 = arith.constant 0 : index
    %c2 = arith.constant 2 : index
    %c0_10 = arith.constant 0 : index
    %c0_11 = arith.constant 0 : index
    %12 = vector.load %arg1[%c0_9, %c2, %c0_10, %c0_11] : memref<1x8x16x256xf32, #tpu.memory_space<vmem>>, vector<1x1x16x256xf32>
    %13 = vector.shape_cast %12 : vector<1x1x16x256xf32> to vector<16x256xf32>
    %cst_12 = arith.constant dense<0.000000e+00> : vector<16xf32>
    %14 = vector.multi_reduction <add>, %13, %cst_12 [1] : vector<16x256xf32> to vector<16xf32>
    %15 = vector.shape_cast %14 : vector<16xf32> to vector<16x1xf32>
    %cst_13 = arith.constant 2.560000e+02 : f32
    %16 = vector.broadcast %cst_13 : f32 to vector<16x1xf32>
    %17 = arith.divf %15, %16 : vector<16x1xf32>
    %c0_14 = arith.constant 0 : index
    %c3 = arith.constant 3 : index
    %c0_15 = arith.constant 0 : index
    %c0_16 = arith.constant 0 : index
    %18 = vector.load %arg1[%c0_14, %c3, %c0_15, %c0_16] : memref<1x8x16x256xf32, #tpu.memory_space<vmem>>, vector<1x1x16x256xf32>
    %19 = vector.shape_cast %18 : vector<1x1x16x256xf32> to vector<16x256xf32>
    %cst_17 = arith.constant dense<0.000000e+00> : vector<16xf32>
    %20 = vector.multi_reduction <add>, %19, %cst_17 [1] : vector<16x256xf32> to vector<16xf32>
    %21 = vector.shape_cast %20 : vector<16xf32> to vector<16x1xf32>
    %cst_18 = arith.constant 2.560000e+02 : f32
    %22 = vector.broadcast %cst_18 : f32 to vector<16x1xf32>
    %23 = arith.divf %21, %22 : vector<16x1xf32>
    %c0_19 = arith.constant 0 : index
    %c4 = arith.constant 4 : index
    %c0_20 = arith.constant 0 : index
    %c0_21 = arith.constant 0 : index
    %24 = vector.load %arg1[%c0_19, %c4, %c0_20, %c0_21] : memref<1x8x16x256xf32, #tpu.memory_space<vmem>>, vector<1x1x16x256xf32>
    %25 = vector.shape_cast %24 : vector<1x1x16x256xf32> to vector<16x256xf32>
    %cst_22 = arith.constant dense<0.000000e+00> : vector<16xf32>
    %26 = vector.multi_reduction <add>, %25, %cst_22 [1] : vector<16x256xf32> to vector<16xf32>
    %27 = vector.shape_cast %26 : vector<16xf32> to vector<16x1xf32>
    %cst_23 = arith.constant 2.560000e+02 : f32
    %28 = vector.broadcast %cst_23 : f32 to vector<16x1xf32>
    %29 = arith.divf %27, %28 : vector<16x1xf32>
    %c0_24 = arith.constant 0 : index
    %c5 = arith.constant 5 : index
    %c0_25 = arith.constant 0 : index
    %c0_26 = arith.constant 0 : index
    %30 = vector.load %arg1[%c0_24, %c5, %c0_25, %c0_26] : memref<1x8x16x256xf32, #tpu.memory_space<vmem>>, vector<1x1x16x256xf32>
    %31 = vector.shape_cast %30 : vector<1x1x16x256xf32> to vector<16x256xf32>
    %cst_27 = arith.constant dense<0.000000e+00> : vector<16xf32>
    %32 = vector.multi_reduction <add>, %31, %cst_27 [1] : vector<16x256xf32> to vector<16xf32>
    %33 = vector.shape_cast %32 : vector<16xf32> to vector<16x1xf32>
    %cst_28 = arith.constant 2.560000e+02 : f32
    %34 = vector.broadcast %cst_28 : f32 to vector<16x1xf32>
    %35 = arith.divf %33, %34 : vector<16x1xf32>
    %c0_29 = arith.constant 0 : index
    %c6 = arith.constant 6 : index
    %c0_30 = arith.constant 0 : index
    %c0_31 = arith.constant 0 : index
    %36 = vector.load %arg1[%c0_29, %c6, %c0_30, %c0_31] : memref<1x8x16x256xf32, #tpu.memory_space<vmem>>, vector<1x1x16x256xf32>
    %37 = vector.shape_cast %36 : vector<1x1x16x256xf32> to vector<16x256xf32>
    %cst_32 = arith.constant dense<0.000000e+00> : vector<16xf32>
    %38 = vector.multi_reduction <add>, %37, %cst_32 [1] : vector<16x256xf32> to vector<16xf32>
    %39 = vector.shape_cast %38 : vector<16xf32> to vector<16x1xf32>
    %cst_33 = arith.constant 2.560000e+02 : f32
    %40 = vector.broadcast %cst_33 : f32 to vector<16x1xf32>
    %41 = arith.divf %39, %40 : vector<16x1xf32>
    %c0_34 = arith.constant 0 : index
    %c7 = arith.constant 7 : index
    %c0_35 = arith.constant 0 : index
    %c0_36 = arith.constant 0 : index
    %42 = vector.load %arg1[%c0_34, %c7, %c0_35, %c0_36] : memref<1x8x16x256xf32, #tpu.memory_space<vmem>>, vector<1x1x16x256xf32>
    %43 = vector.shape_cast %42 : vector<1x1x16x256xf32> to vector<16x256xf32>
    %cst_37 = arith.constant dense<0.000000e+00> : vector<16xf32>
    %44 = vector.multi_reduction <add>, %43, %cst_37 [1] : vector<16x256xf32> to vector<16xf32>
    %45 = vector.shape_cast %44 : vector<16xf32> to vector<16x1xf32>
    %cst_38 = arith.constant 2.560000e+02 : f32
    %46 = vector.broadcast %cst_38 : f32 to vector<16x1xf32>
    %47 = arith.divf %45, %46 : vector<16x1xf32>
    %48 = tpu.concatenate %5, %11, %17, %23, %29, %35, %41, %47 in 1 : vector<16x1xf32>, vector<16x1xf32>, vector<16x1xf32>, vector<16x1xf32>, vector<16x1xf32>, vector<16x1xf32>, vector<16x1xf32>, vector<16x1xf32> -> vector<16x8xf32>
    %c0_39 = arith.constant 0 : index
    %c0_40 = arith.constant 0 : index
    %49 = vector.load %arg2[%c0_39, %c0_40] : memref<8x16xf32, #tpu.memory_space<vmem>>, vector<8x16xf32>
    %cst_41 = arith.constant dense<0.000000e+00> : vector<16x16xf32>
    %50 = tpu.matmul %48, %49, %cst_41 {dimension_numbers = #tpu.dot_dimension_numbers<[1], [0], [0], [1], [0, 0, 1, 1], [], []>} : vector<16x8xf32>, vector<8x16xf32>, vector<16x16xf32> -> vector<16x16xf32>
    %c0_42 = arith.constant 0 : index
    %c0_43 = arith.constant 0 : index
    %51 = vector.load %arg3[%c0_42, %c0_43] : memref<1x16xf32, #tpu.memory_space<vmem>>, vector<1x16xf32>
    %52 = vector.broadcast %51 : vector<1x16xf32> to vector<16x16xf32>
    %53 = arith.mulf %50, %52 : vector<16x16xf32>
    %c0_44 = arith.constant 0 : index
    %c0_45 = arith.constant 0 : index
    %54 = vector.load %arg4[%c0_44, %c0_45] : memref<1x16xf32, #tpu.memory_space<vmem>>, vector<1x16xf32>
    %55 = vector.broadcast %54 : vector<1x16xf32> to vector<16x16xf32>
    %56 = arith.addf %53, %55 : vector<16x16xf32>
    %cst_46 = arith.constant 0.000000e+00 : f32
    %57 = vector.broadcast %cst_46 : f32 to vector<16x16xf32>
    %58 = arith.maximumf %56, %57 : vector<16x16xf32>
    %c0_47 = arith.constant 0 : index
    %c0_48 = arith.constant 0 : index
    %59 = vector.load %arg5[%c0_47, %c0_48] : memref<16x3xf32, #tpu.memory_space<vmem>>, vector<16x3xf32>
    %cst_49 = arith.constant dense<0.000000e+00> : vector<16x3xf32>
    %60 = tpu.matmul %58, %59, %cst_49 {dimension_numbers = #tpu.dot_dimension_numbers<[1], [0], [0], [1], [0, 0, 1, 1], [], []>} : vector<16x16xf32>, vector<16x3xf32>, vector<16x3xf32> -> vector<16x3xf32>
    %cst_50 = arith.constant dense<0xFF800000> : vector<16xf32>
    %61 = vector.multi_reduction <maximumf>, %60, %cst_50 [1] : vector<16x3xf32> to vector<16xf32>
    %62 = vector.shape_cast %61 : vector<16xf32> to vector<16x1xf32>
    %63 = vector.broadcast %62 : vector<16x1xf32> to vector<16x3xf32>
    %64 = arith.subf %60, %63 : vector<16x3xf32>
    %65 = math.exp %64 : vector<16x3xf32>
    %cst_51 = arith.constant dense<0.000000e+00> : vector<16xf32>
    %66 = vector.multi_reduction <add>, %65, %cst_51 [1] : vector<16x3xf32> to vector<16xf32>
    %67 = vector.shape_cast %66 : vector<16xf32> to vector<16x1xf32>
    %68 = vector.broadcast %67 : vector<16x1xf32> to vector<16x3xf32>
    %69 = arith.divf %65, %68 : vector<16x3xf32>
    %cst_52 = arith.constant 0.000000e+00 : f32
    %70 = vector.broadcast %cst_52 : f32 to vector<16x1xf32>
    %71 = tpu.concatenate %70, %48, %70 in 1 : vector<16x1xf32>, vector<16x8xf32>, vector<16x1xf32> -> vector<16x10xf32>
    %72 = vector.extract_strided_slice %71 {offsets = [0, 0], sizes = [16, 8], strides = [1, 1]} : vector<16x10xf32> to vector<16x8xf32>
    %73 = vector.extract_strided_slice %71 {offsets = [0, 1], sizes = [16, 8], strides = [1, 1]} : vector<16x10xf32> to vector<16x8xf32>
    %74 = vector.extract_strided_slice %71 {offsets = [0, 2], sizes = [16, 8], strides = [1, 1]} : vector<16x10xf32> to vector<16x8xf32>
    %75 = tpu.concatenate %72, %73, %74 in 0 : vector<16x8xf32>, vector<16x8xf32>, vector<16x8xf32> -> vector<48x8xf32>
    %c0_53 = arith.constant 0 : index
    %c0_54 = arith.constant 0 : index
    %76 = vector.load %arg6[%c0_53, %c0_54] : memref<4x48xf32, #tpu.memory_space<vmem>>, vector<4x48xf32>
    %cst_55 = arith.constant dense<0.000000e+00> : vector<4x8xf32>
    %77 = tpu.matmul %76, %75, %cst_55 {dimension_numbers = #tpu.dot_dimension_numbers<[1], [0], [0], [1], [0, 0, 1, 1], [], []>} : vector<4x48xf32>, vector<48x8xf32>, vector<4x8xf32> -> vector<4x8xf32>
    %c0_56 = arith.constant 0 : index
    %c0_57 = arith.constant 0 : index
    %78 = vector.load %arg7[%c0_56, %c0_57] : memref<4x1xf32, #tpu.memory_space<vmem>>, vector<4x1xf32>
    %79 = vector.broadcast %78 : vector<4x1xf32> to vector<4x8xf32>
    %80 = arith.mulf %77, %79 : vector<4x8xf32>
    %c0_58 = arith.constant 0 : index
    %c0_59 = arith.constant 0 : index
    %81 = vector.load %arg8[%c0_58, %c0_59] : memref<4x1xf32, #tpu.memory_space<vmem>>, vector<4x1xf32>
    %82 = vector.broadcast %81 : vector<4x1xf32> to vector<4x8xf32>
    %83 = arith.addf %80, %82 : vector<4x8xf32>
    %cst_60 = arith.constant 0.000000e+00 : f32
    %84 = vector.broadcast %cst_60 : f32 to vector<4x8xf32>
    %85 = arith.maximumf %83, %84 : vector<4x8xf32>
    %c0_61 = arith.constant 0 : index
    %c0_62 = arith.constant 0 : index
    %86 = vector.load %arg9[%c0_61, %c0_62] : memref<16x4xf32, #tpu.memory_space<vmem>>, vector<16x4xf32>
    %cst_63 = arith.constant dense<0.000000e+00> : vector<16x8xf32>
    %87 = tpu.matmul %86, %85, %cst_63 {dimension_numbers = #tpu.dot_dimension_numbers<[1], [0], [0], [1], [0, 0, 1, 1], [], []>} : vector<16x4xf32>, vector<4x8xf32>, vector<16x8xf32> -> vector<16x8xf32>
    %cst_64 = arith.constant 0.000000e+00 : f32
    %88 = vector.broadcast %cst_64 : f32 to vector<16x8xf32>
    %89 = arith.subf %88, %87 : vector<16x8xf32>
    %90 = math.exp %89 : vector<16x8xf32>
    %cst_65 = arith.constant 1.000000e+00 : f32
    %91 = vector.broadcast %cst_65 : f32 to vector<16x8xf32>
    %92 = arith.addf %91, %90 : vector<16x8xf32>
    %cst_66 = arith.constant 1.000000e+00 : f32
    %93 = vector.broadcast %cst_66 : f32 to vector<16x8xf32>
    %94 = arith.divf %93, %92 : vector<16x8xf32>
    %95 = vector.extract_strided_slice %69 {offsets = [0, 0], sizes = [16, 1], strides = [1, 1]} : vector<16x3xf32> to vector<16x1xf32>
    %96 = vector.broadcast %95 : vector<16x1xf32> to vector<16x8xf32>
    %97 = arith.mulf %96, %94 : vector<16x8xf32>
    %98 = vector.extract_strided_slice %69 {offsets = [0, 1], sizes = [16, 1], strides = [1, 1]} : vector<16x3xf32> to vector<16x1xf32>
    %99 = vector.broadcast %98 : vector<16x1xf32> to vector<16x8xf32>
    %100 = arith.mulf %99, %94 : vector<16x8xf32>
    %101 = vector.extract_strided_slice %69 {offsets = [0, 2], sizes = [16, 1], strides = [1, 1]} : vector<16x3xf32> to vector<16x1xf32>
    %102 = vector.broadcast %101 : vector<16x1xf32> to vector<16x8xf32>
    %103 = arith.mulf %102, %94 : vector<16x8xf32>
    %104 = vector.extract_strided_slice %100 {offsets = [0, 0], sizes = [16, 1], strides = [1, 1]} : vector<16x8xf32> to vector<16x1xf32>
    %c0_67 = arith.constant 0 : index
    %c0_68 = arith.constant 0 : index
    %c0_69 = arith.constant 0 : index
    %c0_70 = arith.constant 0 : index
    %105 = vector.load %arg1[%c0_67, %c0_68, %c0_69, %c0_70] : memref<1x8x16x256xf32, #tpu.memory_space<vmem>>, vector<1x1x16x256xf32>
    %106 = vector.shape_cast %105 : vector<1x1x16x256xf32> to vector<16x256xf32>
    %107 = vector.broadcast %104 : vector<16x1xf32> to vector<16x256xf32>
    %108 = arith.mulf %107, %106 : vector<16x256xf32>
    %109 = vector.extract_strided_slice %103 {offsets = [0, 1], sizes = [16, 1], strides = [1, 1]} : vector<16x8xf32> to vector<16x1xf32>
    %c0_71 = arith.constant 0 : index
    %c1_72 = arith.constant 1 : index
    %c0_73 = arith.constant 0 : index
    %c0_74 = arith.constant 0 : index
    %110 = vector.load %arg1[%c0_71, %c1_72, %c0_73, %c0_74] : memref<1x8x16x256xf32, #tpu.memory_space<vmem>>, vector<1x1x16x256xf32>
    %111 = vector.shape_cast %110 : vector<1x1x16x256xf32> to vector<16x256xf32>
    %112 = vector.broadcast %109 : vector<16x1xf32> to vector<16x256xf32>
    %113 = arith.mulf %112, %111 : vector<16x256xf32>
    %114 = arith.addf %108, %113 : vector<16x256xf32>
    %c0_75 = arith.constant 0 : index
    %c0_76 = arith.constant 0 : index
    %c0_77 = arith.constant 0 : index
    %c0_78 = arith.constant 0 : index
    %115 = vector.load %arg10[%c0_75, %c0_76, %c0_77, %c0_78] : memref<1x8x16x256xf32, #tpu.memory_space<vmem>>, vector<1x1x16x256xf32>
    %116 = vector.shape_cast %115 : vector<1x1x16x256xf32> to vector<16x256xf32>
    %117 = vector.shape_cast %114 : vector<16x256xf32> to vector<1x1x16x256xf32>
    tpu.vector_store %arg10[%c0_75, %c0_76, %c0_77, %c0_78], %117 {strides = array<i32>} : memref<1x8x16x256xf32, #tpu.memory_space<vmem>>, vector<1x1x16x256xf32>,
    %118 = vector.extract_strided_slice %97 {offsets = [0, 0], sizes = [16, 1], strides = [1, 1]} : vector<16x8xf32> to vector<16x1xf32>
    %c0_79 = arith.constant 0 : index
    %c0_80 = arith.constant 0 : index
    %c0_81 = arith.constant 0 : index
    %c0_82 = arith.constant 0 : index
    %119 = vector.load %arg1[%c0_79, %c0_80, %c0_81, %c0_82] : memref<1x8x16x256xf32, #tpu.memory_space<vmem>>, vector<1x1x16x256xf32>
    %120 = vector.shape_cast %119 : vector<1x1x16x256xf32> to vector<16x256xf32>
    %121 = vector.broadcast %118 : vector<16x1xf32> to vector<16x256xf32>
    %122 = arith.mulf %121, %120 : vector<16x256xf32>
    %123 = vector.extract_strided_slice %100 {offsets = [0, 1], sizes = [16, 1], strides = [1, 1]} : vector<16x8xf32> to vector<16x1xf32>
    %c0_83 = arith.constant 0 : index
    %c1_84 = arith.constant 1 : index
    %c0_85 = arith.constant 0 : index
    %c0_86 = arith.constant 0 : index
    %124 = vector.load %arg1[%c0_83, %c1_84, %c0_85, %c0_86] : memref<1x8x16x256xf32, #tpu.memory_space<vmem>>, vector<1x1x16x256xf32>
    %125 = vector.shape_cast %124 : vector<1x1x16x256xf32> to vector<16x256xf32>
    %126 = vector.broadcast %123 : vector<16x1xf32> to vector<16x256xf32>
    %127 = arith.mulf %126, %125 : vector<16x256xf32>
    %128 = arith.addf %122, %127 : vector<16x256xf32>
    %129 = vector.extract_strided_slice %103 {offsets = [0, 2], sizes = [16, 1], strides = [1, 1]} : vector<16x8xf32> to vector<16x1xf32>
    %c0_87 = arith.constant 0 : index
    %c2_88 = arith.constant 2 : index
    %c0_89 = arith.constant 0 : index
    %c0_90 = arith.constant 0 : index
    %130 = vector.load %arg1[%c0_87, %c2_88, %c0_89, %c0_90] : memref<1x8x16x256xf32, #tpu.memory_space<vmem>>, vector<1x1x16x256xf32>
    %131 = vector.shape_cast %130 : vector<1x1x16x256xf32> to vector<16x256xf32>
    %132 = vector.broadcast %129 : vector<16x1xf32> to vector<16x256xf32>
    %133 = arith.mulf %132, %131 : vector<16x256xf32>
    %134 = arith.addf %128, %133 : vector<16x256xf32>
    %c0_91 = arith.constant 0 : index
    %c1_92 = arith.constant 1 : index
    %c0_93 = arith.constant 0 : index
    %c0_94 = arith.constant 0 : index
    %135 = vector.load %arg10[%c0_91, %c1_92, %c0_93, %c0_94] : memref<1x8x16x256xf32, #tpu.memory_space<vmem>>, vector<1x1x16x256xf32>
    %136 = vector.shape_cast %135 : vector<1x1x16x256xf32> to vector<16x256xf32>
    %137 = vector.shape_cast %134 : vector<16x256xf32> to vector<1x1x16x256xf32>
    tpu.vector_store %arg10[%c0_91, %c1_92, %c0_93, %c0_94], %137 {strides = array<i32>} : memref<1x8x16x256xf32, #tpu.memory_space<vmem>>, vector<1x1x16x256xf32>,
    %138 = vector.extract_strided_slice %97 {offsets = [0, 1], sizes = [16, 1], strides = [1, 1]} : vector<16x8xf32> to vector<16x1xf32>
    %c0_95 = arith.constant 0 : index
    %c1_96 = arith.constant 1 : index
    %c0_97 = arith.constant 0 : index
    %c0_98 = arith.constant 0 : index
    %139 = vector.load %arg1[%c0_95, %c1_96, %c0_97, %c0_98] : memref<1x8x16x256xf32, #tpu.memory_space<vmem>>, vector<1x1x16x256xf32>
    %140 = vector.shape_cast %139 : vector<1x1x16x256xf32> to vector<16x256xf32>
    %141 = vector.broadcast %138 : vector<16x1xf32> to vector<16x256xf32>
    %142 = arith.mulf %141, %140 : vector<16x256xf32>
    %143 = vector.extract_strided_slice %100 {offsets = [0, 2], sizes = [16, 1], strides = [1, 1]} : vector<16x8xf32> to vector<16x1xf32>
    %c0_99 = arith.constant 0 : index
    %c2_100 = arith.constant 2 : index
    %c0_101 = arith.constant 0 : index
    %c0_102 = arith.constant 0 : index
    %144 = vector.load %arg1[%c0_99, %c2_100, %c0_101, %c0_102] : memref<1x8x16x256xf32, #tpu.memory_space<vmem>>, vector<1x1x16x256xf32>
    %145 = vector.shape_cast %144 : vector<1x1x16x256xf32> to vector<16x256xf32>
    %146 = vector.broadcast %143 : vector<16x1xf32> to vector<16x256xf32>
    %147 = arith.mulf %146, %145 : vector<16x256xf32>
    %148 = arith.addf %142, %147 : vector<16x256xf32>
    %149 = vector.extract_strided_slice %103 {offsets = [0, 3], sizes = [16, 1], strides = [1, 1]} : vector<16x8xf32> to vector<16x1xf32>
    %c0_103 = arith.constant 0 : index
    %c3_104 = arith.constant 3 : index
    %c0_105 = arith.constant 0 : index
    %c0_106 = arith.constant 0 : index
    %150 = vector.load %arg1[%c0_103, %c3_104, %c0_105, %c0_106] : memref<1x8x16x256xf32, #tpu.memory_space<vmem>>, vector<1x1x16x256xf32>
    %151 = vector.shape_cast %150 : vector<1x1x16x256xf32> to vector<16x256xf32>
    %152 = vector.broadcast %149 : vector<16x1xf32> to vector<16x256xf32>
    %153 = arith.mulf %152, %151 : vector<16x256xf32>
    %154 = arith.addf %148, %153 : vector<16x256xf32>
    %c0_107 = arith.constant 0 : index
    %c2_108 = arith.constant 2 : index
    %c0_109 = arith.constant 0 : index
    %c0_110 = arith.constant 0 : index
    %155 = vector.load %arg10[%c0_107, %c2_108, %c0_109, %c0_110] : memref<1x8x16x256xf32, #tpu.memory_space<vmem>>, vector<1x1x16x256xf32>
    %156 = vector.shape_cast %155 : vector<1x1x16x256xf32> to vector<16x256xf32>
    %157 = vector.shape_cast %154 : vector<16x256xf32> to vector<1x1x16x256xf32>
    tpu.vector_store %arg10[%c0_107, %c2_108, %c0_109, %c0_110], %157 {strides = array<i32>} : memref<1x8x16x256xf32, #tpu.memory_space<vmem>>, vector<1x1x16x256xf32>,
    %158 = vector.extract_strided_slice %97 {offsets = [0, 2], sizes = [16, 1], strides = [1, 1]} : vector<16x8xf32> to vector<16x1xf32>
    %c0_111 = arith.constant 0 : index
    %c2_112 = arith.constant 2 : index
    %c0_113 = arith.constant 0 : index
    %c0_114 = arith.constant 0 : index
    %159 = vector.load %arg1[%c0_111, %c2_112, %c0_113, %c0_114] : memref<1x8x16x256xf32, #tpu.memory_space<vmem>>, vector<1x1x16x256xf32>
    %160 = vector.shape_cast %159 : vector<1x1x16x256xf32> to vector<16x256xf32>
    %161 = vector.broadcast %158 : vector<16x1xf32> to vector<16x256xf32>
    %162 = arith.mulf %161, %160 : vector<16x256xf32>
    %163 = vector.extract_strided_slice %100 {offsets = [0, 3], sizes = [16, 1], strides = [1, 1]} : vector<16x8xf32> to vector<16x1xf32>
    %c0_115 = arith.constant 0 : index
    %c3_116 = arith.constant 3 : index
    %c0_117 = arith.constant 0 : index
    %c0_118 = arith.constant 0 : index
    %164 = vector.load %arg1[%c0_115, %c3_116, %c0_117, %c0_118] : memref<1x8x16x256xf32, #tpu.memory_space<vmem>>, vector<1x1x16x256xf32>
    %165 = vector.shape_cast %164 : vector<1x1x16x256xf32> to vector<16x256xf32>
    %166 = vector.broadcast %163 : vector<16x1xf32> to vector<16x256xf32>
    %167 = arith.mulf %166, %165 : vector<16x256xf32>
    %168 = arith.addf %162, %167 : vector<16x256xf32>
    %169 = vector.extract_strided_slice %103 {offsets = [0, 4], sizes = [16, 1], strides = [1, 1]} : vector<16x8xf32> to vector<16x1xf32>
    %c0_119 = arith.constant 0 : index
    %c4_120 = arith.constant 4 : index
    %c0_121 = arith.constant 0 : index
    %c0_122 = arith.constant 0 : index
    %170 = vector.load %arg1[%c0_119, %c4_120, %c0_121, %c0_122] : memref<1x8x16x256xf32, #tpu.memory_space<vmem>>, vector<1x1x16x256xf32>
    %171 = vector.shape_cast %170 : vector<1x1x16x256xf32> to vector<16x256xf32>
    %172 = vector.broadcast %169 : vector<16x1xf32> to vector<16x256xf32>
    %173 = arith.mulf %172, %171 : vector<16x256xf32>
    %174 = arith.addf %168, %173 : vector<16x256xf32>
    %c0_123 = arith.constant 0 : index
    %c3_124 = arith.constant 3 : index
    %c0_125 = arith.constant 0 : index
    %c0_126 = arith.constant 0 : index
    %175 = vector.load %arg10[%c0_123, %c3_124, %c0_125, %c0_126] : memref<1x8x16x256xf32, #tpu.memory_space<vmem>>, vector<1x1x16x256xf32>
    %176 = vector.shape_cast %175 : vector<1x1x16x256xf32> to vector<16x256xf32>
    %177 = vector.shape_cast %174 : vector<16x256xf32> to vector<1x1x16x256xf32>
    tpu.vector_store %arg10[%c0_123, %c3_124, %c0_125, %c0_126], %177 {strides = array<i32>} : memref<1x8x16x256xf32, #tpu.memory_space<vmem>>, vector<1x1x16x256xf32>,
    %178 = vector.extract_strided_slice %97 {offsets = [0, 3], sizes = [16, 1], strides = [1, 1]} : vector<16x8xf32> to vector<16x1xf32>
    %c0_127 = arith.constant 0 : index
    %c3_128 = arith.constant 3 : index
    %c0_129 = arith.constant 0 : index
    %c0_130 = arith.constant 0 : index
    %179 = vector.load %arg1[%c0_127, %c3_128, %c0_129, %c0_130] : memref<1x8x16x256xf32, #tpu.memory_space<vmem>>, vector<1x1x16x256xf32>
    %180 = vector.shape_cast %179 : vector<1x1x16x256xf32> to vector<16x256xf32>
    %181 = vector.broadcast %178 : vector<16x1xf32> to vector<16x256xf32>
    %182 = arith.mulf %181, %180 : vector<16x256xf32>
    %183 = vector.extract_strided_slice %100 {offsets = [0, 4], sizes = [16, 1], strides = [1, 1]} : vector<16x8xf32> to vector<16x1xf32>
    %c0_131 = arith.constant 0 : index
    %c4_132 = arith.constant 4 : index
    %c0_133 = arith.constant 0 : index
    %c0_134 = arith.constant 0 : index
    %184 = vector.load %arg1[%c0_131, %c4_132, %c0_133, %c0_134] : memref<1x8x16x256xf32, #tpu.memory_space<vmem>>, vector<1x1x16x256xf32>
    %185 = vector.shape_cast %184 : vector<1x1x16x256xf32> to vector<16x256xf32>
    %186 = vector.broadcast %183 : vector<16x1xf32> to vector<16x256xf32>
    %187 = arith.mulf %186, %185 : vector<16x256xf32>
    %188 = arith.addf %182, %187 : vector<16x256xf32>
    %189 = vector.extract_strided_slice %103 {offsets = [0, 5], sizes = [16, 1], strides = [1, 1]} : vector<16x8xf32> to vector<16x1xf32>
    %c0_135 = arith.constant 0 : index
    %c5_136 = arith.constant 5 : index
    %c0_137 = arith.constant 0 : index
    %c0_138 = arith.constant 0 : index
    %190 = vector.load %arg1[%c0_135, %c5_136, %c0_137, %c0_138] : memref<1x8x16x256xf32, #tpu.memory_space<vmem>>, vector<1x1x16x256xf32>
    %191 = vector.shape_cast %190 : vector<1x1x16x256xf32> to vector<16x256xf32>
    %192 = vector.broadcast %189 : vector<16x1xf32> to vector<16x256xf32>
    %193 = arith.mulf %192, %191 : vector<16x256xf32>
    %194 = arith.addf %188, %193 : vector<16x256xf32>
    %c0_139 = arith.constant 0 : index
    %c4_140 = arith.constant 4 : index
    %c0_141 = arith.constant 0 : index
    %c0_142 = arith.constant 0 : index
    %195 = vector.load %arg10[%c0_139, %c4_140, %c0_141, %c0_142] : memref<1x8x16x256xf32, #tpu.memory_space<vmem>>, vector<1x1x16x256xf32>
    %196 = vector.shape_cast %195 : vector<1x1x16x256xf32> to vector<16x256xf32>
    %197 = vector.shape_cast %194 : vector<16x256xf32> to vector<1x1x16x256xf32>
    tpu.vector_store %arg10[%c0_139, %c4_140, %c0_141, %c0_142], %197 {strides = array<i32>} : memref<1x8x16x256xf32, #tpu.memory_space<vmem>>, vector<1x1x16x256xf32>,
    %198 = vector.extract_strided_slice %97 {offsets = [0, 4], sizes = [16, 1], strides = [1, 1]} : vector<16x8xf32> to vector<16x1xf32>
    %c0_143 = arith.constant 0 : index
    %c4_144 = arith.constant 4 : index
    %c0_145 = arith.constant 0 : index
    %c0_146 = arith.constant 0 : index
    %199 = vector.load %arg1[%c0_143, %c4_144, %c0_145, %c0_146] : memref<1x8x16x256xf32, #tpu.memory_space<vmem>>, vector<1x1x16x256xf32>
    %200 = vector.shape_cast %199 : vector<1x1x16x256xf32> to vector<16x256xf32>
    %201 = vector.broadcast %198 : vector<16x1xf32> to vector<16x256xf32>
    %202 = arith.mulf %201, %200 : vector<16x256xf32>
    %203 = vector.extract_strided_slice %100 {offsets = [0, 5], sizes = [16, 1], strides = [1, 1]} : vector<16x8xf32> to vector<16x1xf32>
    %c0_147 = arith.constant 0 : index
    %c5_148 = arith.constant 5 : index
    %c0_149 = arith.constant 0 : index
    %c0_150 = arith.constant 0 : index
    %204 = vector.load %arg1[%c0_147, %c5_148, %c0_149, %c0_150] : memref<1x8x16x256xf32, #tpu.memory_space<vmem>>, vector<1x1x16x256xf32>
    %205 = vector.shape_cast %204 : vector<1x1x16x256xf32> to vector<16x256xf32>
    %206 = vector.broadcast %203 : vector<16x1xf32> to vector<16x256xf32>
    %207 = arith.mulf %206, %205 : vector<16x256xf32>
    %208 = arith.addf %202, %207 : vector<16x256xf32>
    %209 = vector.extract_strided_slice %103 {offsets = [0, 6], sizes = [16, 1], strides = [1, 1]} : vector<16x8xf32> to vector<16x1xf32>
    %c0_151 = arith.constant 0 : index
    %c6_152 = arith.constant 6 : index
    %c0_153 = arith.constant 0 : index
    %c0_154 = arith.constant 0 : index
    %210 = vector.load %arg1[%c0_151, %c6_152, %c0_153, %c0_154] : memref<1x8x16x256xf32, #tpu.memory_space<vmem>>, vector<1x1x16x256xf32>
    %211 = vector.shape_cast %210 : vector<1x1x16x256xf32> to vector<16x256xf32>
    %212 = vector.broadcast %209 : vector<16x1xf32> to vector<16x256xf32>
    %213 = arith.mulf %212, %211 : vector<16x256xf32>
    %214 = arith.addf %208, %213 : vector<16x256xf32>
    %c0_155 = arith.constant 0 : index
    %c5_156 = arith.constant 5 : index
    %c0_157 = arith.constant 0 : index
    %c0_158 = arith.constant 0 : index
    %215 = vector.load %arg10[%c0_155, %c5_156, %c0_157, %c0_158] : memref<1x8x16x256xf32, #tpu.memory_space<vmem>>, vector<1x1x16x256xf32>
    %216 = vector.shape_cast %215 : vector<1x1x16x256xf32> to vector<16x256xf32>
    %217 = vector.shape_cast %214 : vector<16x256xf32> to vector<1x1x16x256xf32>
    tpu.vector_store %arg10[%c0_155, %c5_156, %c0_157, %c0_158], %217 {strides = array<i32>} : memref<1x8x16x256xf32, #tpu.memory_space<vmem>>, vector<1x1x16x256xf32>,
    %218 = vector.extract_strided_slice %97 {offsets = [0, 5], sizes = [16, 1], strides = [1, 1]} : vector<16x8xf32> to vector<16x1xf32>
    %c0_159 = arith.constant 0 : index
    %c5_160 = arith.constant 5 : index
    %c0_161 = arith.constant 0 : index
    %c0_162 = arith.constant 0 : index
    %219 = vector.load %arg1[%c0_159, %c5_160, %c0_161, %c0_162] : memref<1x8x16x256xf32, #tpu.memory_space<vmem>>, vector<1x1x16x256xf32>
    %220 = vector.shape_cast %219 : vector<1x1x16x256xf32> to vector<16x256xf32>
    %221 = vector.broadcast %218 : vector<16x1xf32> to vector<16x256xf32>
    %222 = arith.mulf %221, %220 : vector<16x256xf32>
    %223 = vector.extract_strided_slice %100 {offsets = [0, 6], sizes = [16, 1], strides = [1, 1]} : vector<16x8xf32> to vector<16x1xf32>
    %c0_163 = arith.constant 0 : index
    %c6_164 = arith.constant 6 : index
    %c0_165 = arith.constant 0 : index
    %c0_166 = arith.constant 0 : index
    %224 = vector.load %arg1[%c0_163, %c6_164, %c0_165, %c0_166] : memref<1x8x16x256xf32, #tpu.memory_space<vmem>>, vector<1x1x16x256xf32>
    %225 = vector.shape_cast %224 : vector<1x1x16x256xf32> to vector<16x256xf32>
    %226 = vector.broadcast %223 : vector<16x1xf32> to vector<16x256xf32>
    %227 = arith.mulf %226, %225 : vector<16x256xf32>
    %228 = arith.addf %222, %227 : vector<16x256xf32>
    %229 = vector.extract_strided_slice %103 {offsets = [0, 7], sizes = [16, 1], strides = [1, 1]} : vector<16x8xf32> to vector<16x1xf32>
    %c0_167 = arith.constant 0 : index
    %c7_168 = arith.constant 7 : index
    %c0_169 = arith.constant 0 : index
    %c0_170 = arith.constant 0 : index
    %230 = vector.load %arg1[%c0_167, %c7_168, %c0_169, %c0_170] : memref<1x8x16x256xf32, #tpu.memory_space<vmem>>, vector<1x1x16x256xf32>
    %231 = vector.shape_cast %230 : vector<1x1x16x256xf32> to vector<16x256xf32>
    %232 = vector.broadcast %229 : vector<16x1xf32> to vector<16x256xf32>
    %233 = arith.mulf %232, %231 : vector<16x256xf32>
    %234 = arith.addf %228, %233 : vector<16x256xf32>
    %c0_171 = arith.constant 0 : index
    %c6_172 = arith.constant 6 : index
    %c0_173 = arith.constant 0 : index
    %c0_174 = arith.constant 0 : index
    %235 = vector.load %arg10[%c0_171, %c6_172, %c0_173, %c0_174] : memref<1x8x16x256xf32, #tpu.memory_space<vmem>>, vector<1x1x16x256xf32>
    %236 = vector.shape_cast %235 : vector<1x1x16x256xf32> to vector<16x256xf32>
    %237 = vector.shape_cast %234 : vector<16x256xf32> to vector<1x1x16x256xf32>
    tpu.vector_store %arg10[%c0_171, %c6_172, %c0_173, %c0_174], %237 {strides = array<i32>} : memref<1x8x16x256xf32, #tpu.memory_space<vmem>>, vector<1x1x16x256xf32>,
    %238 = vector.extract_strided_slice %97 {offsets = [0, 6], sizes = [16, 1], strides = [1, 1]} : vector<16x8xf32> to vector<16x1xf32>
    %c0_175 = arith.constant 0 : index
    %c6_176 = arith.constant 6 : index
    %c0_177 = arith.constant 0 : index
    %c0_178 = arith.constant 0 : index
    %239 = vector.load %arg1[%c0_175, %c6_176, %c0_177, %c0_178] : memref<1x8x16x256xf32, #tpu.memory_space<vmem>>, vector<1x1x16x256xf32>
    %240 = vector.shape_cast %239 : vector<1x1x16x256xf32> to vector<16x256xf32>
    %241 = vector.broadcast %238 : vector<16x1xf32> to vector<16x256xf32>
    %242 = arith.mulf %241, %240 : vector<16x256xf32>
    %243 = vector.extract_strided_slice %100 {offsets = [0, 7], sizes = [16, 1], strides = [1, 1]} : vector<16x8xf32> to vector<16x1xf32>
    %c0_179 = arith.constant 0 : index
    %c7_180 = arith.constant 7 : index
    %c0_181 = arith.constant 0 : index
    %c0_182 = arith.constant 0 : index
    %244 = vector.load %arg1[%c0_179, %c7_180, %c0_181, %c0_182] : memref<1x8x16x256xf32, #tpu.memory_space<vmem>>, vector<1x1x16x256xf32>
    %245 = vector.shape_cast %244 : vector<1x1x16x256xf32> to vector<16x256xf32>
    %246 = vector.broadcast %243 : vector<16x1xf32> to vector<16x256xf32>
    %247 = arith.mulf %246, %245 : vector<16x256xf32>
    %248 = arith.addf %242, %247 : vector<16x256xf32>
    %c0_183 = arith.constant 0 : index
    %c7_184 = arith.constant 7 : index
    %c0_185 = arith.constant 0 : index
    %c0_186 = arith.constant 0 : index
    %249 = vector.load %arg10[%c0_183, %c7_184, %c0_185, %c0_186] : memref<1x8x16x256xf32, #tpu.memory_space<vmem>>, vector<1x1x16x256xf32>
    %250 = vector.shape_cast %249 : vector<1x1x16x256xf32> to vector<16x256xf32>
    %251 = vector.shape_cast %248 : vector<16x256xf32> to vector<1x1x16x256xf32>
    tpu.vector_store %arg10[%c0_183, %c7_184, %c0_185, %c0_186], %251 {strides = array<i32>} : memref<1x8x16x256xf32, #tpu.memory_space<vmem>>, vector<1x1x16x256xf32>,
    return
  }
  func.func @transform_0(%arg0: i32) -> (i32, i32, i32, i32) {
    %c0_i32 = arith.constant 0 : i32
    %c0_i32_0 = arith.constant 0 : i32
    %c0_i32_1 = arith.constant 0 : i32
    %c0_i32_2 = arith.constant 0 : i32
    return %arg0, %c0_i32, %c0_i32_0, %c0_i32_1 : i32, i32, i32, i32
  }
  func.func @transform_1(%arg0: i32) -> (i32, i32) {
    %c0_i32 = arith.constant 0 : i32
    %c0_i32_0 = arith.constant 0 : i32
    %c0_i32_1 = arith.constant 0 : i32
    return %c0_i32, %c0_i32_0 : i32, i32
  }
  func.func @transform_2(%arg0: i32) -> (i32, i32) {
    %c0_i32 = arith.constant 0 : i32
    %c0_i32_0 = arith.constant 0 : i32
    %c0_i32_1 = arith.constant 0 : i32
    return %c0_i32, %c0_i32_0 : i32, i32
  }
  func.func @transform_3(%arg0: i32) -> (i32, i32) {
    %c0_i32 = arith.constant 0 : i32
    %c0_i32_0 = arith.constant 0 : i32
    %c0_i32_1 = arith.constant 0 : i32
    return %c0_i32, %c0_i32_0 : i32, i32
  }
  func.func @transform_4(%arg0: i32) -> (i32, i32) {
    %c0_i32 = arith.constant 0 : i32
    %c0_i32_0 = arith.constant 0 : i32
    %c0_i32_1 = arith.constant 0 : i32
    return %c0_i32, %c0_i32_0 : i32, i32
  }
  func.func @transform_5(%arg0: i32) -> (i32, i32) {
    %c0_i32 = arith.constant 0 : i32
    %c0_i32_0 = arith.constant 0 : i32
    %c0_i32_1 = arith.constant 0 : i32
    return %c0_i32, %c0_i32_0 : i32, i32
  }
  func.func @transform_6(%arg0: i32) -> (i32, i32) {
    %c0_i32 = arith.constant 0 : i32
    %c0_i32_0 = arith.constant 0 : i32
    %c0_i32_1 = arith.constant 0 : i32
    return %c0_i32, %c0_i32_0 : i32, i32
  }
  func.func @transform_7(%arg0: i32) -> (i32, i32) {
    %c0_i32 = arith.constant 0 : i32
    %c0_i32_0 = arith.constant 0 : i32
    %c0_i32_1 = arith.constant 0 : i32
    return %c0_i32, %c0_i32_0 : i32, i32
  }
  func.func @transform_8(%arg0: i32) -> (i32, i32) {
    %c0_i32 = arith.constant 0 : i32
    %c0_i32_0 = arith.constant 0 : i32
    %c0_i32_1 = arith.constant 0 : i32
    return %c0_i32, %c0_i32_0 : i32, i32
  }
  func.func @transform_9(%arg0: i32) -> (i32, i32, i32, i32) {
    %c0_i32 = arith.constant 0 : i32
    %c0_i32_0 = arith.constant 0 : i32
    %c0_i32_1 = arith.constant 0 : i32
    %c0_i32_2 = arith.constant 0 : i32
    return %arg0, %c0_i32, %c0_i32_0, %c0_i32_1 : i32, i32, i32, i32
  }
}

</mosaic_0001>

<llo_original>
// kernel: tam_forward.1
$region0: #{tam_forward.1}
  #allocation0 [shape = 'u32[]', space=smem, size = 0x4, offset = 0x4, fixed_abs, tag = 'smem constant byte address 0x4 - core index']
  #allocation1 [shape = 'u32[72,128]{1,0:T(1,128)}', space=vmem, size = 0x9000, scoped, tag = 'internal scratch']
  %s0 = inlined_call_operand.vmem [shape: f32[2,8,16,256], index: 0, kind: input, shape index: {}]
  %s1 = inlined_call_operand.vmem [shape: f32[8,16], index: 1, kind: input, shape index: {}]
  %s2 = inlined_call_operand.vmem [shape: f32[1,16], index: 2, kind: input, shape index: {}]
  %s3 = inlined_call_operand.vmem [shape: f32[1,16], index: 3, kind: input, shape index: {}]
  %s4 = inlined_call_operand.vmem [shape: f32[16,3], index: 4, kind: input, shape index: {}]
  %s5 = inlined_call_operand.vmem [shape: f32[4,48], index: 5, kind: input, shape index: {}]
  %s6 = inlined_call_operand.vmem [shape: f32[4,1], index: 6, kind: input, shape index: {}]
  %s7 = inlined_call_operand.vmem [shape: f32[4,1], index: 7, kind: input, shape index: {}]
  %s8 = inlined_call_operand.vmem [shape: f32[16,4], index: 8, kind: input, shape index: {}]
  %s9 = inlined_call_operand.vmem [shape: f32[2,8,16,256], index: 9, kind: output, shape index: {}]
  %s10 = sld [smem:[#allocation0]]
  $region69: #{tam_forward.1} parent=0
    _
  %s12 = ssub.s32 1, %s10
  %s13 = scalar_select 0, %s12, %s10
  loop: start=0, step=1, limit=4
  $region2: #{tam_forward.1} parent=0 // loop_pre_header
    _
  $region3: #{tam_forward.1} parent=0 // loop_header
    %s15 = sphi 0, %s19
    %p16 = scmp.ge.s32.totalorder %s15, 4
    %s25 = sphi 0, %s27
    %s28 = sphi 0, %s25
    %s29 = sphi 0, %s28
    %s45 = sphi 0, %s29
    %s49 = sphi 0, %s49
    %s51 = sphi 0, %s49
    %s52 = sphi 0, %s51
    %s66 = sphi 0, %s52
    %s70 = sphi 0, %s70
    %s72 = sphi 0, %s70
    %s73 = sphi 0, %s72
    %s87 = sphi 0, %s73
    %s91 = sphi 0, %s91
    %s93 = sphi 0, %s91
    %s94 = sphi 0, %s93
    %s108 = sphi 0, %s94
    %s112 = sphi 0, %s112
    %s114 = sphi 0, %s112
    %s115 = sphi 0, %s114
    %s129 = sphi 0, %s115
    %s133 = sphi 0, %s133
    %s135 = sphi 0, %s133
    %s136 = sphi 0, %s135
    %s150 = sphi 0, %s136
    %s154 = sphi 0, %s154
    %s156 = sphi 0, %s154
    %s157 = sphi 0, %s156
    %s171 = sphi 0, %s157
    %s175 = sphi 0, %s175
    %s177 = sphi 0, %s175
    %s178 = sphi 0, %s177
    %s192 = sphi 0, %s178
    %s196 = sphi 0, %s196
    %s198 = sphi 0, %s196
    %s199 = sphi 0, %s198
    %s213 = sphi 0, %s199
    %s219 = sphi 0, %s221
    %s222 = sphi 0, %s219
    %s223 = sphi 0, %s222
    %s239 = sphi 0, %s223
  $region4: #{tam_forward.1} parent=0 // loop_header_branch
    %18 = sbr.rel (%p16) target = $region8
  $region5: #{tam_forward.1} parent=0 // loop_body
    %s20 = ssub.s32 %s15, 1
    %s21 = ssub.s32 %s15, 2
    %s22 = sadd.s32 %s15, 1
    %s23 = ssub.s32 %s15, %s22
    %p24 = scmp.eq.s32.totalorder %s23, 0
    %s26 = sadd.s32 %s25, 1
    %s27 = scalar_select %p24, %s25, %s26
    %p30 = pneg %p24
    %p31 = scmp.eq.s32.totalorder %s15, 1
    %p32 = por %p30, %p31
    %p33 = scmp.ne.s32.totalorder %s25, %s28
    %p34 = scmp.eq.s32.totalorder %s15, 0
    %p35 = por %p33, %p34
    %p36 = scmp.ne.s32.totalorder %s25, %s28
    %p37 = scmp.eq.s32.totalorder %s20, 1
    %p38 = por %p36, %p37
    %p39 = scmp.ne.s32.totalorder %s28, %s29
    %p40 = scmp.eq.s32.totalorder %s20, 0
    %p41 = por %p39, %p40
    %p42 = scmp.ne.s32.totalorder %s28, %s29
    %p43 = scmp.eq.s32.totalorder %s21, 1
    %p44 = por %p42, %p43
    %p46 = scmp.ne.s32.totalorder %s29, %s45
    %p47 = scmp.eq.s32.totalorder %s21, 0
    %p48 = por %p46, %p47
    %s50 = sadd.s32 %s49, 1
    %p53 = scmp.eq.s32.totalorder %s15, 1
    %p54 = scmp.ne.s32.totalorder %s49, %s51
    %p55 = scmp.eq.s32.totalorder %s15, 0
    %p56 = por %p54, %p55
    %p57 = scmp.ne.s32.totalorder %s49, %s51
    %p58 = scmp.eq.s32.totalorder %s20, 1
    %p59 = por %p57, %p58
    %p60 = scmp.ne.s32.totalorder %s51, %s52
    %p61 = scmp.eq.s32.totalorder %s20, 0
    %p62 = por %p60, %p61
    %p63 = scmp.ne.s32.totalorder %s51, %s52
    %p64 = scmp.eq.s32.totalorder %s21, 1
    %p65 = por %p63, %p64
    %p67 = scmp.ne.s32.totalorder %s52, %s66
    %p68 = scmp.eq.s32.totalorder %s21, 0
    %p69 = por %p67, %p68
    %s71 = sadd.s32 %s70, 1
    %p74 = scmp.eq.s32.totalorder %s15, 1
    %p75 = scmp.ne.s32.totalorder %s70, %s72
    %p76 = scmp.eq.s32.totalorder %s15, 0
    %p77 = por %p75, %p76
    %p78 = scmp.ne.s32.totalorder %s70, %s72
    %p79 = scmp.eq.s32.totalorder %s20, 1
    %p80 = por %p78, %p79
    %p81 = scmp.ne.s32.totalorder %s72, %s73
    %p82 = scmp.eq.s32.totalorder %s20, 0
    %p83 = por %p81, %p82
    %p84 = scmp.ne.s32.totalorder %s72, %s73
    %p85 = scmp.eq.s32.totalorder %s21, 1
    %p86 = por %p84, %p85
    %p88 = scmp.ne.s32.totalorder %s73, %s87
    %p89 = scmp.eq.s32.totalorder %s21, 0
    %p90 = por %p88, %p89
    %s92 = sadd.s32 %s91, 1
    %p95 = scmp.eq.s32.totalorder %s15, 1
    %p96 = scmp.ne.s32.totalorder %s91, %s93
    %p97 = scmp.eq.s32.totalorder %s15, 0
    %p98 = por %p96, %p97
    %p99 = scmp.ne.s32.totalorder %s91, %s93
    %p100 = scmp.eq.s32.totalorder %s20, 1
    %p101 = por %p99, %p100
    %p102 = scmp.ne.s32.totalorder %s93, %s94
    %p103 = scmp.eq.s32.totalorder %s20, 0
    %p104 = por %p102, %p103
    %p105 = scmp.ne.s32.totalorder %s93, %s94
    %p106 = scmp.eq.s32.totalorder %s21, 1
    %p107 = por %p105, %p106
    %p109 = scmp.ne.s32.totalorder %s94, %s108
    %p110 = scmp.eq.s32.totalorder %s21, 0
    %p111 = por %p109, %p110
    %s113 = sadd.s32 %s112, 1
    %p116 = scmp.eq.s32.totalorder %s15, 1
    %p117 = scmp.ne.s32.totalorder %s112, %s114
    %p118 = scmp.eq.s32.totalorder %s15, 0
    %p119 = por %p117, %p118
    %p120 = scmp.ne.s32.totalorder %s112, %s114
    %p121 = scmp.eq.s32.totalorder %s20, 1
    %p122 = por %p120, %p121
    %p123 = scmp.ne.s32.totalorder %s114, %s115
    %p124 = scmp.eq.s32.totalorder %s20, 0
    %p125 = por %p123, %p124
    %p126 = scmp.ne.s32.totalorder %s114, %s115
    %p127 = scmp.eq.s32.totalorder %s21, 1
    %p128 = por %p126, %p127
    %p130 = scmp.ne.s32.totalorder %s115, %s129
    %p131 = scmp.eq.s32.totalorder %s21, 0
    %p132 = por %p130, %p131
    %s134 = sadd.s32 %s133, 1
    %p137 = scmp.eq.s32.totalorder %s15, 1
    %p138 = scmp.ne.s32.totalorder %s133, %s135
    %p139 = scmp.eq.s32.totalorder %s15, 0
    %p140 = por %p138, %p139
    %p141 = scmp.ne.s32.totalorder %s133, %s135
    %p142 = scmp.eq.s32.totalorder %s20, 1
    %p143 = por %p141, %p142
    %p144 = scmp.ne.s32.totalorder %s135, %s136
    %p145 = scmp.eq.s32.totalorder %s20, 0
    %p146 = por %p144, %p145
    %p147 = scmp.ne.s32.totalorder %s135, %s136
    %p148 = scmp.eq.s32.totalorder %s21, 1
    %p149 = por %p147, %p148
    %p151 = scmp.ne.s32.totalorder %s136, %s150
    %p152 = scmp.eq.s32.totalorder %s21, 0
    %p153 = por %p151, %p152
    %s155 = sadd.s32 %s154, 1
    %p158 = scmp.eq.s32.totalorder %s15, 1
    %p159 = scmp.ne.s32.totalorder %s154, %s156
    %p160 = scmp.eq.s32.totalorder %s15, 0
    %p161 = por %p159, %p160
    %p162 = scmp.ne.s32.totalorder %s154, %s156
    %p163 = scmp.eq.s32.totalorder %s20, 1
    %p164 = por %p162, %p163
    %p165 = scmp.ne.s32.totalorder %s156, %s157
    %p166 = scmp.eq.s32.totalorder %s20, 0
    %p167 = por %p165, %p166
    %p168 = scmp.ne.s32.totalorder %s156, %s157
    %p169 = scmp.eq.s32.totalorder %s21, 1
    %p170 = por %p168, %p169
    %p172 = scmp.ne.s32.totalorder %s157, %s171
    %p173 = scmp.eq.s32.totalorder %s21, 0
    %p174 = por %p172, %p173
    %s176 = sadd.s32 %s175, 1
    %p179 = scmp.eq.s32.totalorder %s15, 1
    %p180 = scmp.ne.s32.totalorder %s175, %s177
    %p181 = scmp.eq.s32.totalorder %s15, 0
    %p182 = por %p180, %p181
    %p183 = scmp.ne.s32.totalorder %s175, %s177
    %p184 = scmp.eq.s32.totalorder %s20, 1
    %p185 = por %p183, %p184
    %p186 = scmp.ne.s32.totalorder %s177, %s178
    %p187 = scmp.eq.s32.totalorder %s20, 0
    %p188 = por %p186, %p187
    %p189 = scmp.ne.s32.totalorder %s177, %s178
    %p190 = scmp.eq.s32.totalorder %s21, 1
    %p191 = por %p189, %p190
    %p193 = scmp.ne.s32.totalorder %s178, %s192
    %p194 = scmp.eq.s32.totalorder %s21, 0
    %p195 = por %p193, %p194
    %s197 = sadd.s32 %s196, 1
    %p200 = scmp.eq.s32.totalorder %s15, 1
    %p201 = scmp.ne.s32.totalorder %s196, %s198
    %p202 = scmp.eq.s32.totalorder %s15, 0
    %p203 = por %p201, %p202
    %p204 = scmp.ne.s32.totalorder %s196, %s198
    %p205 = scmp.eq.s32.totalorder %s20, 1
    %p206 = por %p204, %p205
    %p207 = scmp.ne.s32.totalorder %s198, %s199
    %p208 = scmp.eq.s32.totalorder %s20, 0
    %p209 = por %p207, %p208
    %p210 = scmp.ne.s32.totalorder %s198, %s199
    %p211 = scmp.eq.s32.totalorder %s21, 1
    %p212 = por %p210, %p211
    %p214 = scmp.ne.s32.totalorder %s199, %s213
    %p215 = scmp.eq.s32.totalorder %s21, 0
    %p216 = por %p214, %p215
    %s217 = ssub.s32 %s15, %s22
    %p218 = scmp.eq.s32.totalorder %s217, 0
    %s220 = sadd.s32 %s219, 1
    %s221 = scalar_select %p218, %s219, %s220
    %p224 = pneg %p218
    %p225 = scmp.eq.s32.totalorder %s15, 1
    %p226 = por %p224, %p225
    %p227 = scmp.ne.s32.totalorder %s219, %s222
    %p228 = scmp.eq.s32.totalorder %s15, 0
    %p229 = por %p227, %p228
    %p230 = scmp.ne.s32.totalorder %s219, %s222
    %p231 = scmp.eq.s32.totalorder %s20, 1
    %p232 = por %p230, %p231
    %p233 = scmp.ne.s32.totalorder %s222, %s223
    %p234 = scmp.eq.s32.totalorder %s20, 0
    %p235 = por %p233, %p234
    %p236 = scmp.ne.s32.totalorder %s222, %s223
    %p237 = scmp.eq.s32.totalorder %s21, 1
    %p238 = por %p236, %p237
    %p240 = scmp.ne.s32.totalorder %s223, %s239
    %p241 = scmp.eq.s32.totalorder %s21, 0
    %p242 = por %p240, %p241
    %p243 = scmp.le.s32.totalorder 1, %s15
    %p244 = scmp.lt.s32.totalorder %s15, 3
    %p245 = pnand %p243, %p244
    %p246 = pneg %p245
    // Predicated region
    $region9: #{tam_forward.1} parent=5 // pred_check
      _
    $region10: #{tam_forward.1} parent=5 // pred_check_branch
      %248 = sbr.rel (%p245) target = $region12
    $region11: #{tam_forward.1} parent=5 // pred_region
      %s249 = ssub.s32 %s15, 1
      // Predicated region
      $region13: #{tam_forward.1} parent=11 // pred_check
        %p250 = pneg %p62
      $region14: #{tam_forward.1} parent=11 // pred_check_branch
        %252 = sbr.rel (%p250) target = $region16
      $region15: #{tam_forward.1} parent=11 // pred_region
        _
      $region16: #{tam_forward.1} parent=11 // pred_fallthru
        _
      // Predicated region
      $region17: #{tam_forward.1} parent=11 // pred_check
        %p253 = pneg %p83
      $region18: #{tam_forward.1} parent=11 // pred_check_branch
        %255 = sbr.rel (%p253) target = $region20
      $region19: #{tam_forward.1} parent=11 // pred_region
        _
      $region20: #{tam_forward.1} parent=11 // pred_fallthru
        _
      // Predicated region
      $region21: #{tam_forward.1} parent=11 // pred_check
        %p256 = pneg %p104
      $region22: #{tam_forward.1} parent=11 // pred_check_branch
        %258 = sbr.rel (%p256) target = $region24
      $region23: #{tam_forward.1} parent=11 // pred_region
        _
      $region24: #{tam_forward.1} parent=11 // pred_fallthru
        _
      // Predicated region
      $region25: #{tam_forward.1} parent=11 // pred_check
        %p259 = pneg %p125
      $region26: #{tam_forward.1} parent=11 // pred_check_branch
        %261 = sbr.rel (%p259) target = $region28
      $region27: #{tam_forward.1} parent=11 // pred_region
        _
      $region28: #{tam_forward.1} parent=11 // pred_fallthru
        _
      // Predicated region
      $region29: #{tam_forward.1} parent=11 // pred_check
        %p262 = pneg %p146
      $region30: #{tam_forward.1} parent=11 // pred_check_branch
        %264 = sbr.rel (%p262) target = $region32
      $region31: #{tam_forward.1} parent=11 // pred_region
        _
      $region32: #{tam_forward.1} parent=11 // pred_fallthru
        _
      // Predicated region
      $region33: #{tam_forward.1} parent=11 // pred_check
        %p265 = pneg %p167
      $region34: #{tam_forward.1} parent=11 // pred_check_branch
        %267 = sbr.rel (%p265) target = $region36
      $region35: #{tam_forward.1} parent=11 // pred_region
        _
      $region36: #{tam_forward.1} parent=11 // pred_fallthru
        _
      // Predicated region
      $region37: #{tam_forward.1} parent=11 // pred_check
        %p268 = pneg %p188
      $region38: #{tam_forward.1} parent=11 // pred_check_branch
        %270 = sbr.rel (%p268) target = $region40
      $region39: #{tam_forward.1} parent=11 // pred_region
        _
      $region40: #{tam_forward.1} parent=11 // pred_fallthru
        _
      // Predicated region
      $region41: #{tam_forward.1} parent=11 // pred_check
        %p271 = pneg %p209
      $region42: #{tam_forward.1} parent=11 // pred_check_branch
        %273 = sbr.rel (%p271) target = $region44
      $region43: #{tam_forward.1} parent=11 // pred_region
        _
      $region44: #{tam_forward.1} parent=11 // pred_fallthru
        _
    $region12: #{tam_forward.1} parent=5 // pred_fallthru
      _
    %p274 = scmp.lt.s32.totalorder %s15, 2
    // Predicated region
    $region45: #{tam_forward.1} parent=5 // pred_check
      %p275 = pneg %p274
    $region46: #{tam_forward.1} parent=5 // pred_check_branch
      %277 = sbr.rel (%p275) target = $region48
    $region47: #{tam_forward.1} parent=5 // pred_region
      // Predicated region
      $region49: #{tam_forward.1} parent=47 // pred_check
        %p278 = pneg %p35
      $region50: #{tam_forward.1} parent=47 // pred_check_branch
        %280 = sbr.rel (%p278) target = $region52
      $region51: #{tam_forward.1} parent=47 // pred_region
        %p281 = scmp.lt.s32.totalorder %s15, 1
        %s282 = scalar_select %p281, %s15, 1
        %s283 = smul.addr %s282, 32
        %s284 = smul.addr %s283, 8
        %s285 = scalar_lea.vmem %s0, %s284
      $region52: #{tam_forward.1} parent=47 // pred_fallthru
        _
    $region48: #{tam_forward.1} parent=5 // pred_fallthru
      _
    %p286 = scmp.le.s32.totalorder 1, %s15
    %p287 = scmp.lt.s32.totalorder %s15, 3
    %p288 = pnand %p286, %p287
    %p289 = pneg %p288
    // Predicated region
    $region53: #{tam_forward.1} parent=5 // pred_check
      _
    $region54: #{tam_forward.1} parent=5 // pred_check_branch
      %291 = sbr.rel (%p288) target = $region56
    $region55: #{tam_forward.1} parent=5 // pred_region
      %s292 = ssub.s32 %s15, 1
      %p293 = scmp.lt.s32.totalorder %s20, 1
      %s294 = scalar_select %p293, %s20, 1
      %s295 = smul.addr %s294, 32
      %s296 = smul.addr %s295, 8
      %s297 = scalar_lea.vmem %s0, %s296
      %p298 = pneg %p41
      %p299 = pneg %p38
      %p300 = pneg %p62
      %p301 = pneg %p59
      %p302 = pneg %p83
      %p303 = pneg %p80
      %p304 = pneg %p104
      %p305 = pneg %p101
      %p306 = pneg %p125
      %p307 = pneg %p122
      %p308 = pneg %p146
      %p309 = pneg %p143
      %p310 = pneg %p167
      %p311 = pneg %p164
      %p312 = pneg %p188
      %p313 = pneg %p185
      %p314 = pneg %p209
      %p315 = pneg %p206
      %p316 = pneg %p235
      %p317 = pneg %p232
      %p318 = scmp.lt.s32.totalorder %s20, 1
      %s319 = scalar_select %p318, %s20, 1
      %s320 = smul.addr %s319, 32
      %s321 = smul.addr %s320, 8
      %s322 = scalar_lea.vmem %s9, %s321
      %p323 = scmp.lt.s32.totalorder %s20, 1
      %s324 = scalar_select %p323, %s20, 1
      %s325 = smul.addr %s324, 32
      %s326 = smul.addr %s325, 8
      %s327 = scalar_lea.vmem %s0, %s326
      %p328 = scmp.lt.s32.totalorder %s20, 1
      %s329 = scalar_select %p328, %s20, 1
      %s330 = smul.addr %s329, 32
      %s331 = smul.addr %s330, 8
      %s332 = scalar_lea.vmem %s9, %s331
      %v333 = vld [vmem:[%s327] sm:$0xff]
      %v334 = vld [vmem:[%s327 + $0x8] sm:$0xff]
      %v335 = vld [vmem:[%s327 + $0x10] sm:$0xff]
      %v336 = vld [vmem:[%s327 + $0x18] sm:$0xff]
      %v337 = vadd.f32 %v333, %v334
      %338 = vadd.xlane.f32.xlu0 %v337
      %v339 = vpop.xlane.xlu0 %338
      %v340 = vadd.f32 %v335, %v336
      %341 = vadd.xlane.f32.xlu0 %v340
      %v342 = vpop.xlane.xlu0 %341
      %v343 = vrcp.pop 256.0
      %v344 = vmul.f32 256.0, %v343
      %v345 = vsub.f32 1.0, %v344
      %v346 = vmul.f32 %v343, %v345
      %v347 = vadd.f32 %v343, %v346
      %vm348 = vweird.f32 %v343
      %v349 = vsel %vm348, %v343, %v347
      %v350 = vmul.f32 %v339, %v349
      %v351 = vmul.f32 %v342, %v349
      %s352 = scalar_lea.vmem %s327, 32
      %v353 = vld [vmem:[%s352] sm:$0xff]
      %v354 = vld [vmem:[%s352 + $0x8] sm:$0xff]
      %v355 = vld [vmem:[%s352 + $0x10] sm:$0xff]
      %v356 = vld [vmem:[%s352 + $0x18] sm:$0xff]
      %v357 = vadd.f32 %v353, %v354
      %358 = vadd.xlane.f32.xlu0 %v357
      %v359 = vpop.xlane.xlu0 %358
      %v360 = vadd.f32 %v355, %v356
      %361 = vadd.xlane.f32.xlu0 %v360
      %v362 = vpop.xlane.xlu0 %361
      %v363 = vmul.f32 %v359, %v349
      %v364 = vmul.f32 %v362, %v349
      %s365 = scalar_lea.vmem %s327, 64
      %v366 = vld [vmem:[%s365] sm:$0xff]
      %v367 = vld [vmem:[%s365 + $0x8] sm:$0xff]
      %v368 = vld [vmem:[%s365 + $0x10] sm:$0xff]
      %v369 = vld [vmem:[%s365 + $0x18] sm:$0xff]
      %v370 = vadd.f32 %v366, %v367
      %371 = vadd.xlane.f32.xlu0 %v370
      %v372 = vpop.xlane.xlu0 %371
      %v373 = vadd.f32 %v368, %v369
      %374 = vadd.xlane.f32.xlu0 %v373
      %v375 = vpop.xlane.xlu0 %374
      %v376 = vmul.f32 %v372, %v349
      %v377 = vmul.f32 %v375, %v349
      %s378 = scalar_lea.vmem %s327, 96
      %v379 = vld [vmem:[%s378] sm:$0xff]
      %v380 = vld [vmem:[%s378 + $0x8] sm:$0xff]
      %v381 = vld [vmem:[%s378 + $0x10] sm:$0xff]
      %v382 = vld [vmem:[%s378 + $0x18] sm:$0xff]
      %v383 = vadd.f32 %v379, %v380
      %384 = vadd.xlane.f32.xlu0 %v383
      %v385 = vpop.xlane.xlu0 %384
      %v386 = vadd.f32 %v381, %v382
      %387 = vadd.xlane.f32.xlu0 %v386
      %v388 = vpop.xlane.xlu0 %387
      %v389 = vmul.f32 %v385, %v349
      %v390 = vmul.f32 %v388, %v349
      %s391 = scalar_lea.vmem %s327, 128
      %v392 = vld [vmem:[%s391] sm:$0xff]
      %v393 = vld [vmem:[%s391 + $0x8] sm:$0xff]
      %v394 = vld [vmem:[%s391 + $0x10] sm:$0xff]
      %v395 = vld [vmem:[%s391 + $0x18] sm:$0xff]
      %v396 = vadd.f32 %v392, %v393
      %397 = vadd.xlane.f32.xlu0 %v396
      %v398 = vpop.xlane.xlu0 %397
      %v399 = vadd.f32 %v394, %v395
      %400 = vadd.xlane.f32.xlu0 %v399
      %v401 = vpop.xlane.xlu0 %400
      %v402 = vmul.f32 %v398, %v349
      %v403 = vmul.f32 %v401, %v349
      %s404 = scalar_lea.vmem %s327, 160
      %v405 = vld [vmem:[%s404] sm:$0xff]
      %v406 = vld [vmem:[%s404 + $0x8] sm:$0xff]
      %v407 = vld [vmem:[%s404 + $0x10] sm:$0xff]
      %v408 = vld [vmem:[%s404 + $0x18] sm:$0xff]
      %v409 = vadd.f32 %v405, %v406
      %410 = vadd.xlane.f32.xlu0 %v409
      %v411 = vpop.xlane.xlu0 %410
      %v412 = vadd.f32 %v407, %v408
      %413 = vadd.xlane.f32.xlu0 %v412
      %v414 = vpop.xlane.xlu0 %413
      %v415 = vmul.f32 %v411, %v349
      %v416 = vmul.f32 %v414, %v349
      %s417 = scalar_lea.vmem %s327, 192
      %v418 = vld [vmem:[%s417] sm:$0xff]
      %v419 = vld [vmem:[%s417 + $0x8] sm:$0xff]
      %v420 = vld [vmem:[%s417 + $0x10] sm:$0xff]
      %v421 = vld [vmem:[%s417 + $0x18] sm:$0xff]
      %v422 = vadd.f32 %v418, %v419
      %423 = vadd.xlane.f32.xlu0 %v422
      %v424 = vpop.xlane.xlu0 %423
      %v425 = vadd.f32 %v420, %v421
      %426 = vadd.xlane.f32.xlu0 %v425
      %v427 = vpop.xlane.xlu0 %426
      %v428 = vmul.f32 %v424, %v349
      %v429 = vmul.f32 %v427, %v349
      %s430 = scalar_lea.vmem %s327, 224
      %v431 = vld [vmem:[%s430] sm:$0xff]
      %v432 = vld [vmem:[%s430 + $0x8] sm:$0xff]
      %v433 = vld [vmem:[%s430 + $0x10] sm:$0xff]
      %v434 = vld [vmem:[%s430 + $0x18] sm:$0xff]
      %v435 = vadd.f32 %v431, %v432
      %436 = vadd.xlane.f32.xlu0 %v435
      %v437 = vpop.xlane.xlu0 %436
      %v438 = vadd.f32 %v433, %v434
      %439 = vadd.xlane.f32.xlu0 %v438
      %v440 = vpop.xlane.xlu0 %439
      %v441 = vmul.f32 %v437, %v349
      %v442 = vmul.f32 %v440, %v349
      %vm443 = vcmask 7168
      %v444 = vsel %vm443, %v350, %v363
      %v445 = vsel %vm443, %v351, %v364
      %vm446 = vcmask 15360
      %v447 = vsel %vm446, %v444, %v376
      %v448 = vsel %vm446, %v445, %v377
      %vm449 = vcmask 23552
      %v450 = vsel %vm449, %v447, %v389
      %v451 = vsel %vm449, %v448, %v390
      %vm452 = vcmask 31744
      %v453 = vsel %vm452, %v450, %v402
      %v454 = vsel %vm452, %v451, %v403
      %vm455 = vcmask 39936
      %v456 = vsel %vm455, %v453, %v415
      %v457 = vsel %vm455, %v454, %v416
      %vm458 = vcmask 48128
      %v459 = vsel %vm458, %v456, %v428
      %v460 = vsel %vm458, %v457, %v429
      %vm461 = vcmask 56320
      %v462 = vsel %vm461, %v459, %v441
      %v463 = vsel %vm461, %v460, %v442
      %v464 = vld [vmem:[%s1] sm:$0xff]
      %vm465 = vcmask 64512
      %v467 = vsel %vm465, %v462, 0
      %v470 = vsel %vm465, %v463, 0
      %472 = vmatpush.msra.mxu0 0.0
      %473 = vmatpush.msra.mxu0 0.0
      %474 = vmatpush.msra.mxu0 0.0
      %475 = vmatpush.msra.mxu0 0.0
      %476 = vmatpush.msra.mxu0 0.0
      %477 = vmatpush.msra.mxu0 0.0
      %478 = vmatpush.msra.mxu0 0.0
      %479 = vmatpush.msra.mxu0 0.0
      %480 = vmatpush.msra.mxu0 0.0
      %481 = vmatpush.msra.mxu0 0.0
      %482 = vmatpush.msra.mxu0 0.0
      %483 = vmatpush.msra.mxu0 0.0
      %484 = vmatpush.msra.mxu0 0.0
      %485 = vmatpush.msra.mxu0 0.0
      %486 = vmatpush.msra.mxu0 0.0
      %487 = vmatpush.msra.mxu0 %v464
      %488 = vmatmul.f32.gmra.mxu0 %v467
      %v489 = vpop.f32.mrf.mxu0
      %v490 = vadd.f32 0.0, %v489
      %491 = vmatmul.f32.gmra.mxu0 %v470
      %v492 = vpop.f32.mrf.mxu0
      %v493 = vadd.f32 0.0, %v492
      %494 = vdwg.mxu0
      %v495 = vld [vmem:[%s2] sm:$0x1]
      %v497 = vperm.slane %v495, 0
      %v499 = vmul.f32 %v490, %v497
      %v500 = vmul.f32 %v493, %v497
      %v501 = vld [vmem:[%s3] sm:$0x1]
      %v503 = vperm.slane %v501, 0
      %v505 = vadd.f32 %v499, %v503
      %v506 = vadd.f32 %v500, %v503
      %v507 = vmax.f32 %v505, 0.0
      %v508 = vmax.f32 %v506, 0.0
      %v509 = vld [vmem:[%s4] sm:$0xff]
      %v510 = vld [vmem:[%s4 + $0x8] sm:$0xff]
      %vm511 = vcmask 130048
      %v513 = vsel %vm511, %v507, 0
      %v516 = vsel %vm511, %v508, 0
      %518 = vmatpush.msra.mxu0 0.0
      %519 = vmatpush.msra.mxu0 0.0
      %520 = vmatpush.msra.mxu0 0.0
      %521 = vmatpush.msra.mxu0 0.0
      %522 = vmatpush.msra.mxu0 0.0
      %523 = vmatpush.msra.mxu0 0.0
      %524 = vmatpush.msra.mxu0 0.0
      %525 = vmatpush.msra.mxu0 0.0
      %526 = vmatpush.msra.mxu0 0.0
      %527 = vmatpush.msra.mxu0 0.0
      %528 = vmatpush.msra.mxu0 0.0
      %529 = vmatpush.msra.mxu0 0.0
      %530 = vmatpush.msra.mxu0 0.0
      %531 = vmatpush.msra.mxu0 0.0
      %532 = vmatpush.msra.mxu0 %v510
      %533 = vmatpush.msra.mxu0 %v509
      %534 = vmatmul.f32.gmra.mxu0 %v513
      %v535 = vpop.f32.mrf.mxu0
      %v536 = vadd.f32 0.0, %v535
      %537 = vmatmul.f32.gmra.mxu0 %v516
      %v538 = vpop.f32.mrf.mxu0
      %v539 = vadd.f32 0.0, %v538
      %540 = vdwg.mxu0
      %v541 = vsel %vm449, %v536, -inf
      %542 = vmax.xlane.f32.xlu0 %v541
      %v543 = vpop.xlane.xlu0 %542
      %v544 = vsel %vm449, %v539, -inf
      %545 = vmax.xlane.f32.xlu0 %v544
      %v546 = vpop.xlane.xlu0 %545
      %v547 = vsub.f32 %v536, %v543
      %v548 = vsub.f32 %v539, %v546
      %v549 = vmul.f32 %v547, 1.442695
      %v550 = vpow.pop %v549
      %v551 = vmul.f32 %v548, 1.442695
      %v552 = vpow.pop %v551
      %v553 = vsel %vm449, %v550, 0.0
      %554 = vadd.xlane.f32.xlu0 %v553
      %v555 = vpop.xlane.xlu0 %554
      %v556 = vsel %vm449, %v552, 0.0
      %557 = vadd.xlane.f32.xlu0 %v556
      %v558 = vpop.xlane.xlu0 %557
      %v559 = vrcp.pop %v555
      %v560 = vmul.f32 %v555, %v559
      %v561 = vsub.f32 1.0, %v560
      %v562 = vmul.f32 %v559, %v561
      %v563 = vadd.f32 %v559, %v562
      %vm564 = vweird.f32 %v555
      %vm565 = vweird.f32 %v559
      %vm566 = vmor %vm564, %vm565
      %v567 = vsel %vm566, %v559, %v563
      %v568 = vand.u32 2147483647, %v555
      %vm569 = vcmp.eq.f32.partialorder %v568, 8.507059e+37
      %v570 = vand.u32 %v555, 2147483648
      %v571 = vor.u32 1.1754944e-38, %v570
      %v572 = vsel %vm569, %v571, %v567
      %v573 = vmul.f32 %v550, %v572
      %v574 = vrcp.pop %v558
      %v575 = vmul.f32 %v558, %v574
      %v576 = vsub.f32 1.0, %v575
      %v577 = vmul.f32 %v574, %v576
      %v578 = vadd.f32 %v574, %v577
      %vm579 = vweird.f32 %v558
      %vm580 = vweird.f32 %v574
      %vm581 = vmor %vm579, %vm580
      %v582 = vsel %vm581, %v574, %v578
      %v583 = vand.u32 2147483647, %v558
      %vm584 = vcmp.eq.f32.partialorder %v583, 8.507059e+37
      %v585 = vand.u32 %v558, 2147483648
      %v586 = vor.u32 1.1754944e-38, %v585
      %v587 = vsel %vm584, %v586, %v582
      %v588 = vmul.f32 %v552, %v587
      %589 = vrot.lane.b32.xlu0 %v462, 1
      %v590 = vpop.permute.xlu0 %589
      %591 = vrot.lane.b32.xlu0 %v463, 1
      %v592 = vpop.permute.xlu0 %591
      %v595 = vsel %vm443, 0.0, %v590
      %v596 = vsel %vm443, 0.0, %v592
      %vm597 = vcmask 72704
      %v598 = vsel %vm597, %v595, 0.0
      %v599 = vsel %vm597, %v596, 0.0
      %602 = vrot.lane.b32.xlu0 %v598, 127
      %v603 = vpop.permute.xlu0 %602
      %604 = vrot.lane.b32.xlu0 %v599, 127
      %v605 = vpop.permute.xlu0 %604
      %608 = vrot.lane.b32.xlu0 %v598, 126
      %v609 = vpop.permute.xlu0 %608
      %610 = vrot.lane.b32.xlu0 %v599, 126
      %v611 = vpop.permute.xlu0 %610
      %v614 = vld [vmem:[%s5] sm:$0xf]
      %vm615 = vcmask 392192
      %v617 = vsel %vm615, %v614, 0
      %619 = vmatpush.msra.mxu0 0.0
      %620 = vmatpush.msra.mxu0 0.0
      %621 = vmatpush.msra.mxu0 0.0
      %622 = vmatpush.msra.mxu0 0.0
      %623 = vmatpush.msra.mxu0 0.0
      %624 = vmatpush.msra.mxu0 0.0
      %625 = vmatpush.msra.mxu0 0.0
      %626 = vmatpush.msra.mxu0 0.0
      %627 = vmatpush.msra.mxu0 0.0
      %628 = vmatpush.msra.mxu0 0.0
      %629 = vmatpush.msra.mxu0 %v611
      %630 = vmatpush.msra.mxu0 %v609
      %631 = vmatpush.msra.mxu0 %v605
      %632 = vmatpush.msra.mxu0 %v603
      %633 = vmatpush.msra.mxu0 %v599
      %634 = vmatpush.msra.mxu0 %v598
      %635 = vmatmul.f32.gmra.mxu0 %v617
      %v636 = vpop.f32.mrf.mxu0
      %v637 = vadd.f32 0.0, %v636
      %638 = vdwg.mxu0
      %v639 = vld [vmem:[%s6] sm:$0xf]
      %641 = vset.pattern.permute.xlu0 0
      %642 = vperm.xlu0 %641, %v639
      %v643 = vpop.permute.xlu0 %642
      %v645 = vmul.f32 %v637, %v643
      %v646 = vld [vmem:[%s7] sm:$0xf]
      %648 = vset.pattern.permute.xlu0 0
      %649 = vperm.xlu0 %648, %v646
      %v650 = vpop.permute.xlu0 %649
      %v652 = vadd.f32 %v645, %v650
      %v653 = vmax.f32 %v652, 0.0
      %v654 = vld [vmem:[%s8] sm:$0xff]
      %v655 = vld [vmem:[%s8 + $0x8] sm:$0xff]
      %v657 = vsel %vm452, %v654, 0
      %v660 = vsel %vm452, %v655, 0
      %vm662 = vcmask 1043456
      %v664 = vsel %vm662, %v653, 0
      %666 = vmatpush.msra.mxu0 0.0
      %667 = vmatpush.msra.mxu0 0.0
      %668 = vmatpush.msra.mxu0 0.0
      %669 = vmatpush.msra.mxu0 0.0
      %670 = vmatpush.msra.mxu0 0.0
      %671 = vmatpush.msra.mxu0 0.0
      %672 = vmatpush.msra.mxu0 0.0
      %673 = vmatpush.msra.mxu0 0.0
      %674 = vmatpush.msra.mxu0 0.0
      %675 = vmatpush.msra.mxu0 0.0
      %676 = vmatpush.msra.mxu0 0.0
      %677 = vmatpush.msra.mxu0 0.0
      %678 = vmatpush.msra.mxu0 0.0
      %679 = vmatpush.msra.mxu0 0.0
      %680 = vmatpush.msra.mxu0 0.0
      %681 = vmatpush.msra.mxu0 %v664
      %682 = vmatmul.f32.gmra.mxu0 %v657
      %v683 = vpop.f32.mrf.mxu0
      %v684 = vadd.f32 0.0, %v683
      %685 = vmatmul.f32.gmra.mxu0 %v660
      %v686 = vpop.f32.mrf.mxu0
      %v687 = vadd.f32 0.0, %v686
      %688 = vdwg.mxu0
      %v689 = vsub.f32 0.0, %v684
      %v690 = vsub.f32 0.0, %v687
      %v691 = vmul.f32 %v689, 1.442695
      %v692 = vpow.pop %v691
      %v693 = vmul.f32 %v690, 1.442695
      %v694 = vpow.pop %v693
      %v695 = vadd.f32 %v692, 1.0
      %v696 = vadd.f32 %v694, 1.0
      %v697 = vrcp.pop %v695
      %v698 = vmul.f32 %v695, %v697
      %v699 = vsub.f32 1.0, %v698
      %v700 = vmul.f32 %v697, %v699
      %v701 = vadd.f32 %v697, %v700
      %vm702 = vweird.f32 %v695
      %vm703 = vweird.f32 %v697
      %vm704 = vmor %vm702, %vm703
      %v705 = vsel %vm704, %v697, %v701
      %v706 = vand.u32 2147483647, %v695
      %vm707 = vcmp.eq.f32.partialorder %v706, 8.507059e+37
      %v708 = vand.u32 %v695, 2147483648
      %v709 = vor.u32 1.1754944e-38, %v708
      %v710 = vsel %vm707, %v709, %v705
      %v711 = vmul.f32 1.0, %v710
      %v712 = vrcp.pop %v696
      %v713 = vmul.f32 %v696, %v712
      %v714 = vsub.f32 1.0, %v713
      %v715 = vmul.f32 %v712, %v714
      %v716 = vadd.f32 %v712, %v715
      %vm717 = vweird.f32 %v696
      %vm718 = vweird.f32 %v712
      %vm719 = vmor %vm717, %vm718
      %v720 = vsel %vm719, %v712, %v716
      %v721 = vand.u32 2147483647, %v696
      %vm722 = vcmp.eq.f32.partialorder %v721, 8.507059e+37
      %v723 = vand.u32 %v696, 2147483648
      %v724 = vor.u32 1.1754944e-38, %v723
      %v725 = vsel %vm722, %v724, %v720
      %v726 = vmul.f32 1.0, %v725
      %728 = vset.pattern.permute.xlu0 0
      %729 = vperm.xlu0 %728, %v573
      %v730 = vpop.permute.xlu0 %729
      %733 = vset.pattern.permute.xlu0 0
      %734 = vperm.xlu0 %733, %v588
      %v735 = vpop.permute.xlu0 %734
      %v737 = vmul.f32 %v730, %v711
      %v738 = vmul.f32 %v735, %v726
      %739 = vset.pattern.permute.xlu0 1
      %740 = vperm.xlu0 %739, %v573
      %v741 = vpop.permute.xlu0 %740
      %743 = vset.pattern.permute.xlu0 1
      %744 = vperm.xlu0 %743, %v588
      %v745 = vpop.permute.xlu0 %744
      %v747 = vmul.f32 %v741, %v711
      %v748 = vmul.f32 %v745, %v726
      %749 = vset.pattern.permute.xlu0 2
      %750 = vperm.xlu0 %749, %v573
      %v751 = vpop.permute.xlu0 %750
      %753 = vset.pattern.permute.xlu0 2
      %754 = vperm.xlu0 %753, %v588
      %v755 = vpop.permute.xlu0 %754
      %v757 = vmul.f32 %v751, %v711
      %v758 = vmul.f32 %v755, %v726
      %760 = vset.pattern.permute.xlu0 0
      %761 = vperm.xlu0 %760, %v747
      %v762 = vpop.permute.xlu0 %761
      %765 = vset.pattern.permute.xlu0 0
      %766 = vperm.xlu0 %765, %v748
      %v767 = vpop.permute.xlu0 %766
      %v769 = vmul.f32 %v762, %v333
      %v770 = vmul.f32 %v762, %v334
      %v771 = vmul.f32 %v767, %v335
      %v772 = vmul.f32 %v767, %v336
      %774 = vset.pattern.permute.xlu0 1
      %775 = vperm.xlu0 %774, %v757
      %v776 = vpop.permute.xlu0 %775
      %779 = vset.pattern.permute.xlu0 1
      %780 = vperm.xlu0 %779, %v758
      %v781 = vpop.permute.xlu0 %780
      %v783 = vmul.f32 %v776, %v353
      %v784 = vmul.f32 %v776, %v354
      %v785 = vmul.f32 %v781, %v355
      %v786 = vmul.f32 %v781, %v356
      %v787 = vadd.f32 %v769, %v783
      %v788 = vadd.f32 %v770, %v784
      %v789 = vadd.f32 %v771, %v785
      %v790 = vadd.f32 %v772, %v786
      %791 = vst [vmem:[%s332] sm:$0xff] %v787
      %792 = vst [vmem:[%s332 + $0x8] sm:$0xff] %v788
      %793 = vst [vmem:[%s332 + $0x10] sm:$0xff] %v789
      %794 = vst [vmem:[%s332 + $0x18] sm:$0xff] %v790
      %v795 = vld [vmem:[%s327] sm:$0xff]
      %v796 = vld [vmem:[%s327 + $0x8] sm:$0xff]
      %v797 = vld [vmem:[%s327 + $0x10] sm:$0xff]
      %v798 = vld [vmem:[%s327 + $0x18] sm:$0xff]
      %800 = vset.pattern.permute.xlu0 0
      %801 = vperm.xlu0 %800, %v737
      %v802 = vpop.permute.xlu0 %801
      %805 = vset.pattern.permute.xlu0 0
      %806 = vperm.xlu0 %805, %v738
      %v807 = vpop.permute.xlu0 %806
      %v809 = vmul.f32 %v802, %v795
      %v810 = vmul.f32 %v802, %v796
      %v811 = vmul.f32 %v807, %v797
      %v812 = vmul.f32 %v807, %v798
      %v813 = vld [vmem:[%s352] sm:$0xff]
      %v814 = vld [vmem:[%s352 + $0x8] sm:$0xff]
      %v815 = vld [vmem:[%s352 + $0x10] sm:$0xff]
      %v816 = vld [vmem:[%s352 + $0x18] sm:$0xff]
      %817 = vset.pattern.permute.xlu0 1
      %818 = vperm.xlu0 %817, %v747
      %v819 = vpop.permute.xlu0 %818
      %821 = vset.pattern.permute.xlu0 1
      %822 = vperm.xlu0 %821, %v748
      %v823 = vpop.permute.xlu0 %822
      %v825 = vmul.f32 %v819, %v813
      %v826 = vmul.f32 %v819, %v814
      %v827 = vmul.f32 %v823, %v815
      %v828 = vmul.f32 %v823, %v816
      %v829 = vadd.f32 %v809, %v825
      %v830 = vadd.f32 %v810, %v826
      %v831 = vadd.f32 %v811, %v827
      %v832 = vadd.f32 %v812, %v828
      %v833 = vld [vmem:[%s365] sm:$0xff]
      %v834 = vld [vmem:[%s365 + $0x8] sm:$0xff]
      %v835 = vld [vmem:[%s365 + $0x10] sm:$0xff]
      %v836 = vld [vmem:[%s365 + $0x18] sm:$0xff]
      %837 = vset.pattern.permute.xlu0 2
      %838 = vperm.xlu0 %837, %v757
      %v839 = vpop.permute.xlu0 %838
      %841 = vset.pattern.permute.xlu0 2
      %842 = vperm.xlu0 %841, %v758
      %v843 = vpop.permute.xlu0 %842
      %v845 = vmul.f32 %v839, %v833
      %v846 = vmul.f32 %v839, %v834
      %v847 = vmul.f32 %v843, %v835
      %v848 = vmul.f32 %v843, %v836
      %v849 = vadd.f32 %v829, %v845
      %v850 = vadd.f32 %v830, %v846
      %v851 = vadd.f32 %v831, %v847
      %v852 = vadd.f32 %v832, %v848
      %s853 = scalar_lea.vmem %s332, 32
      %854 = vst [vmem:[%s853] sm:$0xff] %v849
      %855 = vst [vmem:[%s853 + $0x8] sm:$0xff] %v850
      %856 = vst [vmem:[%s853 + $0x10] sm:$0xff] %v851
      %857 = vst [vmem:[%s853 + $0x18] sm:$0xff] %v852
      %v858 = vld [vmem:[%s352] sm:$0xff]
      %v859 = vld [vmem:[%s352 + $0x8] sm:$0xff]
      %v860 = vld [vmem:[%s352 + $0x10] sm:$0xff]
      %v861 = vld [vmem:[%s352 + $0x18] sm:$0xff]
      %862 = vset.pattern.permute.xlu0 1
      %863 = vperm.xlu0 %862, %v737
      %v864 = vpop.permute.xlu0 %863
      %866 = vset.pattern.permute.xlu0 1
      %867 = vperm.xlu0 %866, %v738
      %v868 = vpop.permute.xlu0 %867
      %v870 = vmul.f32 %v864, %v858
      %v871 = vmul.f32 %v864, %v859
      %v872 = vmul.f32 %v868, %v860
      %v873 = vmul.f32 %v868, %v861
      %v874 = vld [vmem:[%s365] sm:$0xff]
      %v875 = vld [vmem:[%s365 + $0x8] sm:$0xff]
      %v876 = vld [vmem:[%s365 + $0x10] sm:$0xff]
      %v877 = vld [vmem:[%s365 + $0x18] sm:$0xff]
      %878 = vset.pattern.permute.xlu0 2
      %879 = vperm.xlu0 %878, %v747
      %v880 = vpop.permute.xlu0 %879
      %882 = vset.pattern.permute.xlu0 2
      %883 = vperm.xlu0 %882, %v748
      %v884 = vpop.permute.xlu0 %883
      %v886 = vmul.f32 %v880, %v874
      %v887 = vmul.f32 %v880, %v875
      %v888 = vmul.f32 %v884, %v876
      %v889 = vmul.f32 %v884, %v877
      %v890 = vadd.f32 %v870, %v886
      %v891 = vadd.f32 %v871, %v887
      %v892 = vadd.f32 %v872, %v888
      %v893 = vadd.f32 %v873, %v889
      %v894 = vld [vmem:[%s378] sm:$0xff]
      %v895 = vld [vmem:[%s378 + $0x8] sm:$0xff]
      %v896 = vld [vmem:[%s378 + $0x10] sm:$0xff]
      %v897 = vld [vmem:[%s378 + $0x18] sm:$0xff]
      %898 = vset.pattern.permute.xlu0 3
      %899 = vperm.xlu0 %898, %v757
      %v900 = vpop.permute.xlu0 %899
      %902 = vset.pattern.permute.xlu0 3
      %903 = vperm.xlu0 %902, %v758
      %v904 = vpop.permute.xlu0 %903
      %v906 = vmul.f32 %v900, %v894
      %v907 = vmul.f32 %v900, %v895
      %v908 = vmul.f32 %v904, %v896
      %v909 = vmul.f32 %v904, %v897
      %v910 = vadd.f32 %v890, %v906
      %v911 = vadd.f32 %v891, %v907
      %v912 = vadd.f32 %v892, %v908
      %v913 = vadd.f32 %v893, %v909
      %s914 = scalar_lea.vmem %s332, 64
      %915 = vst [vmem:[%s914] sm:$0xff] %v910
      %916 = vst [vmem:[%s914 + $0x8] sm:$0xff] %v911
      %917 = vst [vmem:[%s914 + $0x10] sm:$0xff] %v912
      %918 = vst [vmem:[%s914 + $0x18] sm:$0xff] %v913
      %v919 = vld [vmem:[%s365] sm:$0xff]
      %v920 = vld [vmem:[%s365 + $0x8] sm:$0xff]
      %v921 = vld [vmem:[%s365 + $0x10] sm:$0xff]
      %v922 = vld [vmem:[%s365 + $0x18] sm:$0xff]
      %923 = vset.pattern.permute.xlu0 2
      %924 = vperm.xlu0 %923, %v737
      %v925 = vpop.permute.xlu0 %924
      %927 = vset.pattern.permute.xlu0 2
      %928 = vperm.xlu0 %927, %v738
      %v929 = vpop.permute.xlu0 %928
      %v931 = vmul.f32 %v925, %v919
      %v932 = vmul.f32 %v925, %v920
      %v933 = vmul.f32 %v929, %v921
      %v934 = vmul.f32 %v929, %v922
      %v935 = vld [vmem:[%s378] sm:$0xff]
      %v936 = vld [vmem:[%s378 + $0x8] sm:$0xff]
      %v937 = vld [vmem:[%s378 + $0x10] sm:$0xff]
      %v938 = vld [vmem:[%s378 + $0x18] sm:$0xff]
      %939 = vset.pattern.permute.xlu0 3
      %940 = vperm.xlu0 %939, %v747
      %v941 = vpop.permute.xlu0 %940
      %943 = vset.pattern.permute.xlu0 3
      %944 = vperm.xlu0 %943, %v748
      %v945 = vpop.permute.xlu0 %944
      %v947 = vmul.f32 %v941, %v935
      %v948 = vmul.f32 %v941, %v936
      %v949 = vmul.f32 %v945, %v937
      %v950 = vmul.f32 %v945, %v938
      %v951 = vadd.f32 %v931, %v947
      %v952 = vadd.f32 %v932, %v948
      %v953 = vadd.f32 %v933, %v949
      %v954 = vadd.f32 %v934, %v950
      %v955 = vld [vmem:[%s391] sm:$0xff]
      %v956 = vld [vmem:[%s391 + $0x8] sm:$0xff]
      %v957 = vld [vmem:[%s391 + $0x10] sm:$0xff]
      %v958 = vld [vmem:[%s391 + $0x18] sm:$0xff]
      %959 = vset.pattern.permute.xlu0 4
      %960 = vperm.xlu0 %959, %v757
      %v961 = vpop.permute.xlu0 %960
      %963 = vset.pattern.permute.xlu0 4
      %964 = vperm.xlu0 %963, %v758
      %v965 = vpop.permute.xlu0 %964
      %v967 = vmul.f32 %v961, %v955
      %v968 = vmul.f32 %v961, %v956
      %v969 = vmul.f32 %v965, %v957
      %v970 = vmul.f32 %v965, %v958
      %v971 = vadd.f32 %v951, %v967
      %v972 = vadd.f32 %v952, %v968
      %v973 = vadd.f32 %v953, %v969
      %v974 = vadd.f32 %v954, %v970
      %s975 = scalar_lea.vmem %s332, 96
      %976 = vst [vmem:[%s975] sm:$0xff] %v971
      %977 = vst [vmem:[%s975 + $0x8] sm:$0xff] %v972
      %978 = vst [vmem:[%s975 + $0x10] sm:$0xff] %v973
      %979 = vst [vmem:[%s975 + $0x18] sm:$0xff] %v974
      %v980 = vld [vmem:[%s378] sm:$0xff]
      %v981 = vld [vmem:[%s378 + $0x8] sm:$0xff]
      %v982 = vld [vmem:[%s378 + $0x10] sm:$0xff]
      %v983 = vld [vmem:[%s378 + $0x18] sm:$0xff]
      %984 = vset.pattern.permute.xlu0 3
      %985 = vperm.xlu0 %984, %v737
      %v986 = vpop.permute.xlu0 %985
      %988 = vset.pattern.permute.xlu0 3
      %989 = vperm.xlu0 %988, %v738
      %v990 = vpop.permute.xlu0 %989
      %v992 = vmul.f32 %v986, %v980
      %v993 = vmul.f32 %v986, %v981
      %v994 = vmul.f32 %v990, %v982
      %v995 = vmul.f32 %v990, %v983
      %v996 = vld [vmem:[%s391] sm:$0xff]
      %v997 = vld [vmem:[%s391 + $0x8] sm:$0xff]
      %v998 = vld [vmem:[%s391 + $0x10] sm:$0xff]
      %v999 = vld [vmem:[%s391 + $0x18] sm:$0xff]
      %1000 = vset.pattern.permute.xlu0 4
      %1001 = vperm.xlu0 %1000, %v747
      %v1002 = vpop.permute.xlu0 %1001
      %1004 = vset.pattern.permute.xlu0 4
      %1005 = vperm.xlu0 %1004, %v748
      %v1006 = vpop.permute.xlu0 %1005
      %v1008 = vmul.f32 %v1002, %v996
      %v1009 = vmul.f32 %v1002, %v997
      %v1010 = vmul.f32 %v1006, %v998
      %v1011 = vmul.f32 %v1006, %v999
      %v1012 = vadd.f32 %v992, %v1008
      %v1013 = vadd.f32 %v993, %v1009
      %v1014 = vadd.f32 %v994, %v1010
      %v1015 = vadd.f32 %v995, %v1011
      %v1016 = vld [vmem:[%s404] sm:$0xff]
      %v1017 = vld [vmem:[%s404 + $0x8] sm:$0xff]
      %v1018 = vld [vmem:[%s404 + $0x10] sm:$0xff]
      %v1019 = vld [vmem:[%s404 + $0x18] sm:$0xff]
      %1020 = vset.pattern.permute.xlu0 5
      %1021 = vperm.xlu0 %1020, %v757
      %v1022 = vpop.permute.xlu0 %1021
      %1024 = vset.pattern.permute.xlu0 5
      %1025 = vperm.xlu0 %1024, %v758
      %v1026 = vpop.permute.xlu0 %1025
      %v1028 = vmul.f32 %v1022, %v1016
      %v1029 = vmul.f32 %v1022, %v1017
      %v1030 = vmul.f32 %v1026, %v1018
      %v1031 = vmul.f32 %v1026, %v1019
      %v1032 = vadd.f32 %v1012, %v1028
      %v1033 = vadd.f32 %v1013, %v1029
      %v1034 = vadd.f32 %v1014, %v1030
      %v1035 = vadd.f32 %v1015, %v1031
      %s1036 = scalar_lea.vmem %s332, 128
      %1037 = vst [vmem:[%s1036] sm:$0xff] %v1032
      %1038 = vst [vmem:[%s1036 + $0x8] sm:$0xff] %v1033
      %1039 = vst [vmem:[%s1036 + $0x10] sm:$0xff] %v1034
      %1040 = vst [vmem:[%s1036 + $0x18] sm:$0xff] %v1035
      %v1041 = vld [vmem:[%s391] sm:$0xff]
      %v1042 = vld [vmem:[%s391 + $0x8] sm:$0xff]
      %v1043 = vld [vmem:[%s391 + $0x10] sm:$0xff]
      %v1044 = vld [vmem:[%s391 + $0x18] sm:$0xff]
      %1045 = vset.pattern.permute.xlu0 4
      %1046 = vperm.xlu0 %1045, %v737
      %v1047 = vpop.permute.xlu0 %1046
      %1049 = vset.pattern.permute.xlu0 4
      %1050 = vperm.xlu0 %1049, %v738
      %v1051 = vpop.permute.xlu0 %1050
      %v1053 = vmul.f32 %v1047, %v1041
      %v1054 = vmul.f32 %v1047, %v1042
      %v1055 = vmul.f32 %v1051, %v1043
      %v1056 = vmul.f32 %v1051, %v1044
      %v1057 = vld [vmem:[%s404] sm:$0xff]
      %v1058 = vld [vmem:[%s404 + $0x8] sm:$0xff]
      %v1059 = vld [vmem:[%s404 + $0x10] sm:$0xff]
      %v1060 = vld [vmem:[%s404 + $0x18] sm:$0xff]
      %1061 = vset.pattern.permute.xlu0 5
      %1062 = vperm.xlu0 %1061, %v747
      %v1063 = vpop.permute.xlu0 %1062
      %1065 = vset.pattern.permute.xlu0 5
      %1066 = vperm.xlu0 %1065, %v748
      %v1067 = vpop.permute.xlu0 %1066
      %v1069 = vmul.f32 %v1063, %v1057
      %v1070 = vmul.f32 %v1063, %v1058
      %v1071 = vmul.f32 %v1067, %v1059
      %v1072 = vmul.f32 %v1067, %v1060
      %v1073 = vadd.f32 %v1053, %v1069
      %v1074 = vadd.f32 %v1054, %v1070
      %v1075 = vadd.f32 %v1055, %v1071
      %v1076 = vadd.f32 %v1056, %v1072
      %v1077 = vld [vmem:[%s417] sm:$0xff]
      %v1078 = vld [vmem:[%s417 + $0x8] sm:$0xff]
      %v1079 = vld [vmem:[%s417 + $0x10] sm:$0xff]
      %v1080 = vld [vmem:[%s417 + $0x18] sm:$0xff]
      %1081 = vset.pattern.permute.xlu0 6
      %1082 = vperm.xlu0 %1081, %v757
      %v1083 = vpop.permute.xlu0 %1082
      %1085 = vset.pattern.permute.xlu0 6
      %1086 = vperm.xlu0 %1085, %v758
      %v1087 = vpop.permute.xlu0 %1086
      %v1089 = vmul.f32 %v1083, %v1077
      %v1090 = vmul.f32 %v1083, %v1078
      %v1091 = vmul.f32 %v1087, %v1079
      %v1092 = vmul.f32 %v1087, %v1080
      %v1093 = vadd.f32 %v1073, %v1089
      %v1094 = vadd.f32 %v1074, %v1090
      %v1095 = vadd.f32 %v1075, %v1091
      %v1096 = vadd.f32 %v1076, %v1092
      %s1097 = scalar_lea.vmem %s332, 160
      %1098 = vst [vmem:[%s1097] sm:$0xff] %v1093
      %1099 = vst [vmem:[%s1097 + $0x8] sm:$0xff] %v1094
      %1100 = vst [vmem:[%s1097 + $0x10] sm:$0xff] %v1095
      %1101 = vst [vmem:[%s1097 + $0x18] sm:$0xff] %v1096
      %v1102 = vld [vmem:[%s404] sm:$0xff]
      %v1103 = vld [vmem:[%s404 + $0x8] sm:$0xff]
      %v1104 = vld [vmem:[%s404 + $0x10] sm:$0xff]
      %v1105 = vld [vmem:[%s404 + $0x18] sm:$0xff]
      %1106 = vset.pattern.permute.xlu0 5
      %1107 = vperm.xlu0 %1106, %v737
      %v1108 = vpop.permute.xlu0 %1107
      %1110 = vset.pattern.permute.xlu0 5
      %1111 = vperm.xlu0 %1110, %v738
      %v1112 = vpop.permute.xlu0 %1111
      %v1114 = vmul.f32 %v1108, %v1102
      %v1115 = vmul.f32 %v1108, %v1103
      %v1116 = vmul.f32 %v1112, %v1104
      %v1117 = vmul.f32 %v1112, %v1105
      %v1118 = vld [vmem:[%s417] sm:$0xff]
      %v1119 = vld [vmem:[%s417 + $0x8] sm:$0xff]
      %v1120 = vld [vmem:[%s417 + $0x10] sm:$0xff]
      %v1121 = vld [vmem:[%s417 + $0x18] sm:$0xff]
      %1122 = vset.pattern.permute.xlu0 6
      %1123 = vperm.xlu0 %1122, %v747
      %v1124 = vpop.permute.xlu0 %1123
      %1126 = vset.pattern.permute.xlu0 6
      %1127 = vperm.xlu0 %1126, %v748
      %v1128 = vpop.permute.xlu0 %1127
      %v1130 = vmul.f32 %v1124, %v1118
      %v1131 = vmul.f32 %v1124, %v1119
      %v1132 = vmul.f32 %v1128, %v1120
      %v1133 = vmul.f32 %v1128, %v1121
      %v1134 = vadd.f32 %v1114, %v1130
      %v1135 = vadd.f32 %v1115, %v1131
      %v1136 = vadd.f32 %v1116, %v1132
      %v1137 = vadd.f32 %v1117, %v1133
      %v1138 = vld [vmem:[%s430] sm:$0xff]
      %v1139 = vld [vmem:[%s430 + $0x8] sm:$0xff]
      %v1140 = vld [vmem:[%s430 + $0x10] sm:$0xff]
      %v1141 = vld [vmem:[%s430 + $0x18] sm:$0xff]
      %1142 = vset.pattern.permute.xlu0 7
      %1143 = vperm.xlu0 %1142, %v757
      %v1144 = vpop.permute.xlu0 %1143
      %1146 = vset.pattern.permute.xlu0 7
      %1147 = vperm.xlu0 %1146, %v758
      %v1148 = vpop.permute.xlu0 %1147
      %v1150 = vmul.f32 %v1144, %v1138
      %v1151 = vmul.f32 %v1144, %v1139
      %v1152 = vmul.f32 %v1148, %v1140
      %v1153 = vmul.f32 %v1148, %v1141
      %v1154 = vadd.f32 %v1134, %v1150
      %v1155 = vadd.f32 %v1135, %v1151
      %v1156 = vadd.f32 %v1136, %v1152
      %v1157 = vadd.f32 %v1137, %v1153
      %s1158 = scalar_lea.vmem %s332, 192
      %1159 = vst [vmem:[%s1158] sm:$0xff] %v1154
      %1160 = vst [vmem:[%s1158 + $0x8] sm:$0xff] %v1155
      %1161 = vst [vmem:[%s1158 + $0x10] sm:$0xff] %v1156
      %1162 = vst [vmem:[%s1158 + $0x18] sm:$0xff] %v1157
      %v1163 = vld [vmem:[%s417] sm:$0xff]
      %v1164 = vld [vmem:[%s417 + $0x8] sm:$0xff]
      %v1165 = vld [vmem:[%s417 + $0x10] sm:$0xff]
      %v1166 = vld [vmem:[%s417 + $0x18] sm:$0xff]
      %1167 = vset.pattern.permute.xlu0 6
      %1168 = vperm.xlu0 %1167, %v737
      %v1169 = vpop.permute.xlu0 %1168
      %1171 = vset.pattern.permute.xlu0 6
      %1172 = vperm.xlu0 %1171, %v738
      %v1173 = vpop.permute.xlu0 %1172
      %v1175 = vmul.f32 %v1169, %v1163
      %v1176 = vmul.f32 %v1169, %v1164
      %v1177 = vmul.f32 %v1173, %v1165
      %v1178 = vmul.f32 %v1173, %v1166
      %v1179 = vld [vmem:[%s430] sm:$0xff]
      %v1180 = vld [vmem:[%s430 + $0x8] sm:$0xff]
      %v1181 = vld [vmem:[%s430 + $0x10] sm:$0xff]
      %v1182 = vld [vmem:[%s430 + $0x18] sm:$0xff]
      %1183 = vset.pattern.permute.xlu0 7
      %1184 = vperm.xlu0 %1183, %v747
      %v1185 = vpop.permute.xlu0 %1184
      %1187 = vset.pattern.permute.xlu0 7
      %1188 = vperm.xlu0 %1187, %v748
      %v1189 = vpop.permute.xlu0 %1188
      %v1191 = vmul.f32 %v1185, %v1179
      %v1192 = vmul.f32 %v1185, %v1180
      %v1193 = vmul.f32 %v1189, %v1181
      %v1194 = vmul.f32 %v1189, %v1182
      %v1195 = vadd.f32 %v1175, %v1191
      %v1196 = vadd.f32 %v1176, %v1192
      %v1197 = vadd.f32 %v1177, %v1193
      %v1198 = vadd.f32 %v1178, %v1194
      %s1199 = scalar_lea.vmem %s332, 224
      %1200 = vst [vmem:[%s1199] sm:$0xff] %v1195
      %1201 = vst [vmem:[%s1199 + $0x8] sm:$0xff] %v1196
      %1202 = vst [vmem:[%s1199 + $0x10] sm:$0xff] %v1197
      %1203 = vst [vmem:[%s1199 + $0x18] sm:$0xff] %v1198
      %p1204 = scmp.lt.s32.totalorder %s20, 1
      %s1205 = scalar_select %p1204, %s20, 1
      %s1206 = smul.addr %s1205, 32
      %s1207 = smul.addr %s1206, 8
      %s1208 = scalar_lea.vmem %s9, %s1207
      // Predicated region
      $region57: #{tam_forward.1} parent=55 // pred_check
        %p1209 = pneg %p232
      $region58: #{tam_forward.1} parent=55 // pred_check_branch
        %1211 = sbr.rel (%p1209) target = $region60
      $region59: #{tam_forward.1} parent=55 // pred_region
        _
      $region60: #{tam_forward.1} parent=55 // pred_fallthru
        _
    $region56: #{tam_forward.1} parent=5 // pred_fallthru
      _
    %p1212 = scmp.le.s32.totalorder 2, %s15
    // Predicated region
    $region61: #{tam_forward.1} parent=5 // pred_check
      %p1213 = pneg %p1212
    $region62: #{tam_forward.1} parent=5 // pred_check_branch
      %1215 = sbr.rel (%p1213) target = $region64
    $region63: #{tam_forward.1} parent=5 // pred_region
      %s1216 = ssub.s32 %s15, 2
      // Predicated region
      $region65: #{tam_forward.1} parent=63 // pred_check
        %p1217 = pneg %p238
      $region66: #{tam_forward.1} parent=63 // pred_check_branch
        %1219 = sbr.rel (%p1217) target = $region68
      $region67: #{tam_forward.1} parent=63 // pred_region
        %p1220 = scmp.lt.s32.totalorder %s21, 1
        %s1221 = scalar_select %p1220, %s21, 1
        %s1222 = smul.addr %s1221, 32
        %s1223 = smul.addr %s1222, 8
        %s1224 = scalar_lea.vmem %s9, %s1223
      $region68: #{tam_forward.1} parent=63 // pred_fallthru
        _
    $region64: #{tam_forward.1} parent=5 // pred_fallthru
      _
  $region6: #{tam_forward.1} parent=0 // loop_footer
    %s19 = sadd.s32 1, %s15
  $region7: #{tam_forward.1} parent=0 // loop_footer_branch
    %14 = sbr.rel target = $region3
  $region8: #{tam_forward.1} parent=0 // loop_exit
    _

</llo_original>
